<compile_context>
chip_gen: v6e
topology: v6e:2x2x1
jax: 0.10.0
libtpu: 0.0.40
codegen_flags: <defaults>
</compile_context>

<pallas_src>
import math

import jax
import jax.numpy as jnp
from jax.experimental import pallas as pl
from jax.experimental.pallas import tpu as pltpu  # noqa: F401  (TPU backend clarity)

# ---- model config (small, consistent with the module) ----
B = 2          # batch
S = 8          # sequence length
D_MODEL = 32   # d_model
NUM_HEADS = 4
D_K = D_MODEL // NUM_HEADS
D_FF = 64
LN_EPS = 1e-5
N_ROWS = B * S

# rows of the packed parameter-vector slab (one (8, 128) f32 VMEM tile)
(_ROW_BQKV, _ROW_BO, _ROW_G1, _ROW_B1,
 _ROW_BFF1, _ROW_BFF2, _ROW_G2, _ROW_B2) = range(8)
VEC_ROWS, VEC_LANES = 8, 128


def _layernorm_ref(x, gamma, beta):
    """Two-pass LayerNorm (reference only)."""
    mu = jnp.mean(x, axis=-1, keepdims=True)
    var = jnp.mean(jnp.square(x - mu), axis=-1, keepdims=True)
    return (x - mu) * jax.lax.rsqrt(var + LN_EPS) * gamma + beta


def _layernorm_onepass(x, gamma, beta):
    """One-pass LayerNorm used in the kernel: var = E[x^2] - mu^2 (biased, as nn.LayerNorm)."""
    mu = jnp.mean(x, axis=-1, keepdims=True)
    ms = jnp.mean(x * x, axis=-1, keepdims=True)
    var = ms - mu * mu
    return (x - mu) * jax.lax.rsqrt(var + LN_EPS) * gamma + beta


def transformer_block_kernel(x_ref, wqkv_ref, wo_ref, w1_ref, w2_ref, vec_ref, o_ref):
    x = x_ref[...]                                          # (N_ROWS, D_MODEL)

    # ---- fused, lane-padded QKV projection (1/sqrt(d_k) pre-folded into Q cols/bias) ----
    # wqkv is (32, 128): [Q*scale | K | V | zero-pad]; bias row is the full 128 lanes.
    qkv = (jnp.dot(x, wqkv_ref[...], preferred_element_type=jnp.float32)
           + vec_ref[_ROW_BQKV:_ROW_BQKV + 1, :])           # (N_ROWS, 128)

    # ---- stack heads into one batch dim: (B*H, S, D_K), leading index = h*B + b ----
    def head_stack(base):
        return jnp.concatenate(
            [qkv[:, base + h * D_K: base + (h + 1) * D_K].reshape(B, S, D_K)
             for h in range(NUM_HEADS)],
            axis=0)

    q = head_stack(0)                                       # (B*H, S, D_K), scale pre-folded
    k = head_stack(D_MODEL)
    v = head_stack(2 * D_MODEL)

    # ---- ONE scores einsum, ONE softmax chain, ONE context einsum for all heads/batches ----
    s = jnp.einsum("bqd,bkd->bqk", q, k,
                   preferred_element_type=jnp.float32)      # (B*H, S, S)
    s = s - jnp.max(s, axis=-1, keepdims=True)
    p = jnp.exp(s)
    p = p * pl.reciprocal(jnp.sum(p, axis=-1, keepdims=True), approx=False)
    ctx = jnp.einsum("bqk,bkd->bqd", p, v,
                     preferred_element_type=jnp.float32)    # (B*H, S, D_K)

    # ---- output projection: W_o folded per head (ctx @ W_o == sum_h ctx_h @ W_o[h]) ----
    attn = jnp.zeros((N_ROWS, D_MODEL), jnp.float32)
    for h in range(NUM_HEADS):
        ctx_h = ctx[h * B:(h + 1) * B].reshape(N_ROWS, D_K)          # rows back in (b, s) order
        attn = attn + jnp.dot(ctx_h, wo_ref[h * D_K:(h + 1) * D_K, :],
                              preferred_element_type=jnp.float32)
    attn = attn + vec_ref[_ROW_BO:_ROW_BO + 1, :D_MODEL]

    # ---- LayerNorm 1 (dropout is identity at eval; module has no residual) ----
    x1 = _layernorm_onepass(attn,
                            vec_ref[_ROW_G1:_ROW_G1 + 1, :D_MODEL],
                            vec_ref[_ROW_B1:_ROW_B1 + 1, :D_MODEL])

    # ---- FeedForward ----
    h1 = (jnp.dot(x1, w1_ref[...], preferred_element_type=jnp.float32)
          + vec_ref[_ROW_BFF1:_ROW_BFF1 + 1, :D_FF])
    h1 = jnp.maximum(h1, 0.0)
    ff = (jnp.dot(h1, w2_ref[...], preferred_element_type=jnp.float32)
          + vec_ref[_ROW_BFF2:_ROW_BFF2 + 1, :D_MODEL])

    # ---- LayerNorm 2 ----
    out = _layernorm_onepass(ff,
                             vec_ref[_ROW_G2:_ROW_G2 + 1, :D_MODEL],
                             vec_ref[_ROW_B2:_ROW_B2 + 1, :D_MODEL])

    o_ref[...] = out.astype(o_ref.dtype)


def pack_params(p):
    """One-time host-side packing: fuse QKV (padded to 128 lanes), fold 1/sqrt(d_k) into
    W_q/b_q, and stack all small per-channel vectors into a single (8, 128) slab."""
    scale = 1.0 / math.sqrt(float(D_K))
    wqkv = jnp.concatenate([p["wq"] * scale, p["wk"], p["wv"]], axis=1)   # (32, 96)
    wqkv = jnp.pad(wqkv, ((0, 0), (0, VEC_LANES - 3 * D_MODEL)))          # (32, 128)

    vec = jnp.zeros((VEC_ROWS, VEC_LANES), jnp.float32)
    vec = vec.at[_ROW_BQKV, :3 * D_MODEL].set(
        jnp.concatenate([p["bq"] * scale, p["bk"], p["bv"]]))
    vec = vec.at[_ROW_BO, :D_MODEL].set(p["bo"])
    vec = vec.at[_ROW_G1, :D_MODEL].set(p["g1"])
    vec = vec.at[_ROW_B1, :D_MODEL].set(p["beta1"])
    vec = vec.at[_ROW_BFF1, :D_FF].set(p["bff1"])
    vec = vec.at[_ROW_BFF2, :D_MODEL].set(p["bff2"])
    vec = vec.at[_ROW_G2, :D_MODEL].set(p["g2"])
    vec = vec.at[_ROW_B2, :D_MODEL].set(p["beta2"])

    return {"wqkv": wqkv, "wo": p["wo"], "w1": p["w1"], "w2": p["w2"], "vec": vec}


# Advisory cost estimate so XLA can overlap this latency-bound custom call with
# surrounding graph work (rough: ~0.3 MFLOP, ~550 transcendentals, ~45 KiB traffic).
_COST = pl.CostEstimate(flops=320_000, transcendentals=560, bytes_accessed=45_056)


@jax.jit
def pc_transformer_block(x, packed):
    """x: (B, S, D_MODEL) float32. packed: output of pack_params."""
    b, s, d = x.shape
    out = pl.pallas_call(
        transformer_block_kernel,
        out_shape=jax.ShapeDtypeStruct((b * s, d), jnp.float32),
        cost_estimate=_COST,
    )(x.reshape(b * s, d),
      packed["wqkv"], packed["wo"], packed["w1"], packed["w2"], packed["vec"])
    return out.reshape(b, s, d)


def init_params(key):
    """Deterministic synthetic parameters. Linear weights stored as [in, out]."""
    ks = jax.random.split(key, 16)
    nrm = lambda k, shape, sc=0.05: sc * jax.random.normal(k, shape, dtype=jnp.float32)
    return {
        "wq": nrm(ks[0], (D_MODEL, D_MODEL)), "bq": nrm(ks[1], (D_MODEL,)),
        "wk": nrm(ks[2], (D_MODEL, D_MODEL)), "bk": nrm(ks[3], (D_MODEL,)),
        "wv": nrm(ks[4], (D_MODEL, D_MODEL)), "bv": nrm(ks[5], (D_MODEL,)),
        "wo": nrm(ks[6], (D_MODEL, D_MODEL)), "bo": nrm(ks[7], (D_MODEL,)),
        "g1": 1.0 + nrm(ks[8], (D_MODEL,), 0.02), "beta1": nrm(ks[9], (D_MODEL,), 0.02),
        "w1": nrm(ks[10], (D_MODEL, D_FF)), "bff1": nrm(ks[11], (D_FF,)),
        "w2": nrm(ks[12], (D_FF, D_MODEL)), "bff2": nrm(ks[13], (D_MODEL,)),
        "g2": 1.0 + nrm(ks[14], (D_MODEL,), 0.02), "beta2": nrm(ks[15], (D_MODEL,), 0.02),
    }


def reference_forward(x, p):
    """Pure-JAX reference mirroring the PyTorch module (eval mode)."""
    q = x @ p["wq"] + p["bq"]
    k = x @ p["wk"] + p["bk"]
    v = x @ p["wv"] + p["bv"]

    def split(t):  # (B,S,D) -> (B,H,S,dk)
        return t.reshape(B, S, NUM_HEADS, D_K).transpose(0, 2, 1, 3)

    qh, kh, vh = split(q), split(k), split(v)
    scores = jnp.einsum("bhqd,bhkd->bhqk", qh, kh) / jnp.sqrt(jnp.float32(D_K))
    attn = jax.nn.softmax(scores, axis=-1)
    ctx = jnp.einsum("bhqk,bhkd->bhqd", attn, vh)
    ctx = ctx.transpose(0, 2, 1, 3).reshape(B, S, D_MODEL)
    attn_out = ctx @ p["wo"] + p["bo"]
    x1 = _layernorm_ref(attn_out, p["g1"], p["beta1"])
    ff = jnp.maximum(x1 @ p["w1"] + p["bff1"], 0.0) @ p["w2"] + p["bff2"]
    return _layernorm_ref(ff, p["g2"], p["beta2"])


if __name__ == "__main__":
    key = jax.random.PRNGKey(0)
    kx, kp = jax.random.split(key)
    x = jax.random.normal(kx, (B, S, D_MODEL), dtype=jnp.float32)
    params = init_params(kp)
    packed = pack_params(params)

    out = pc_transformer_block(x, packed)
    out = jax.block_until_ready(out)

    ref = reference_forward(x, params)
    assert out.shape == (B, S, D_MODEL)
    max_err = float(jnp.max(jnp.abs(out - ref)))
    assert jnp.allclose(out, ref, atol=1e-4, rtol=1e-4), max_err
    print("KERNEL_OK")
</pallas_src>

<mosaic_0001>
module attributes {stable_mosaic.version = 11 : i64} {
  func.func @transformer_block_kernel(%arg0: memref<16x32xf32, #tpu.memory_space<vmem>>, %arg1: memref<32x128xf32, #tpu.memory_space<vmem>>, %arg2: memref<32x32xf32, #tpu.memory_space<vmem>>, %arg3: memref<32x64xf32, #tpu.memory_space<vmem>>, %arg4: memref<64x32xf32, #tpu.memory_space<vmem>>, %arg5: memref<8x128xf32, #tpu.memory_space<vmem>>, %arg6: memref<16x32xf32, #tpu.memory_space<vmem>>) attributes {dimension_semantics = [], scalar_prefetch = 0 : i64, scratch_operands = 0 : i64, tpu.core_type = #tpu.core_type<tc>} {
    %c0 = arith.constant 0 : index
    %c0_0 = arith.constant 0 : index
    %0 = vector.load %arg0[%c0, %c0_0] : memref<16x32xf32, #tpu.memory_space<vmem>>, vector<16x32xf32>
    %c0_1 = arith.constant 0 : index
    %c0_2 = arith.constant 0 : index
    %1 = vector.load %arg1[%c0_1, %c0_2] : memref<32x128xf32, #tpu.memory_space<vmem>>, vector<32x128xf32>
    %cst = arith.constant dense<0.000000e+00> : vector<16x128xf32>
    %2 = tpu.matmul %0, %1, %cst {dimension_numbers = #tpu.dot_dimension_numbers<[1], [0], [0], [1], [0, 0, 1, 1], [], []>} : vector<16x32xf32>, vector<32x128xf32>, vector<16x128xf32> -> vector<16x128xf32>
    %c0_3 = arith.constant 0 : index
    %c0_4 = arith.constant 0 : index
    %3 = vector.load %arg5[%c0_3, %c0_4] : memref<8x128xf32, #tpu.memory_space<vmem>>, vector<1x128xf32>
    %4 = vector.broadcast %3 : vector<1x128xf32> to vector<16x128xf32>
    %5 = arith.addf %2, %4 : vector<16x128xf32>
    %6 = vector.extract_strided_slice %5 {offsets = [0, 0], sizes = [16, 8], strides = [1, 1]} : vector<16x128xf32> to vector<16x8xf32>
    %7 = vector.shape_cast %6 : vector<16x8xf32> to vector<2x8x8xf32>
    %8 = vector.extract_strided_slice %5 {offsets = [0, 8], sizes = [16, 8], strides = [1, 1]} : vector<16x128xf32> to vector<16x8xf32>
    %9 = vector.shape_cast %8 : vector<16x8xf32> to vector<2x8x8xf32>
    %10 = vector.extract_strided_slice %5 {offsets = [0, 16], sizes = [16, 8], strides = [1, 1]} : vector<16x128xf32> to vector<16x8xf32>
    %11 = vector.shape_cast %10 : vector<16x8xf32> to vector<2x8x8xf32>
    %12 = vector.extract_strided_slice %5 {offsets = [0, 24], sizes = [16, 8], strides = [1, 1]} : vector<16x128xf32> to vector<16x8xf32>
    %13 = vector.shape_cast %12 : vector<16x8xf32> to vector<2x8x8xf32>
    %14 = tpu.concatenate %7, %9, %11, %13 in 0 : vector<2x8x8xf32>, vector<2x8x8xf32>, vector<2x8x8xf32>, vector<2x8x8xf32> -> vector<8x8x8xf32>
    %15 = vector.extract_strided_slice %5 {offsets = [0, 32], sizes = [16, 8], strides = [1, 1]} : vector<16x128xf32> to vector<16x8xf32>
    %16 = vector.shape_cast %15 : vector<16x8xf32> to vector<2x8x8xf32>
    %17 = vector.extract_strided_slice %5 {offsets = [0, 40], sizes = [16, 8], strides = [1, 1]} : vector<16x128xf32> to vector<16x8xf32>
    %18 = vector.shape_cast %17 : vector<16x8xf32> to vector<2x8x8xf32>
    %19 = vector.extract_strided_slice %5 {offsets = [0, 48], sizes = [16, 8], strides = [1, 1]} : vector<16x128xf32> to vector<16x8xf32>
    %20 = vector.shape_cast %19 : vector<16x8xf32> to vector<2x8x8xf32>
    %21 = vector.extract_strided_slice %5 {offsets = [0, 56], sizes = [16, 8], strides = [1, 1]} : vector<16x128xf32> to vector<16x8xf32>
    %22 = vector.shape_cast %21 : vector<16x8xf32> to vector<2x8x8xf32>
    %23 = tpu.concatenate %16, %18, %20, %22 in 0 : vector<2x8x8xf32>, vector<2x8x8xf32>, vector<2x8x8xf32>, vector<2x8x8xf32> -> vector<8x8x8xf32>
    %24 = vector.extract_strided_slice %5 {offsets = [0, 64], sizes = [16, 8], strides = [1, 1]} : vector<16x128xf32> to vector<16x8xf32>
    %25 = vector.shape_cast %24 : vector<16x8xf32> to vector<2x8x8xf32>
    %26 = vector.extract_strided_slice %5 {offsets = [0, 72], sizes = [16, 8], strides = [1, 1]} : vector<16x128xf32> to vector<16x8xf32>
    %27 = vector.shape_cast %26 : vector<16x8xf32> to vector<2x8x8xf32>
    %28 = vector.extract_strided_slice %5 {offsets = [0, 80], sizes = [16, 8], strides = [1, 1]} : vector<16x128xf32> to vector<16x8xf32>
    %29 = vector.shape_cast %28 : vector<16x8xf32> to vector<2x8x8xf32>
    %30 = vector.extract_strided_slice %5 {offsets = [0, 88], sizes = [16, 8], strides = [1, 1]} : vector<16x128xf32> to vector<16x8xf32>
    %31 = vector.shape_cast %30 : vector<16x8xf32> to vector<2x8x8xf32>
    %32 = tpu.concatenate %25, %27, %29, %31 in 0 : vector<2x8x8xf32>, vector<2x8x8xf32>, vector<2x8x8xf32>, vector<2x8x8xf32> -> vector<8x8x8xf32>
    "tpu.trace_start"() <{level = 10 : i32, message = "bqd,bkd->bqk"}> : () -> ()
    %cst_5 = arith.constant dense<0.000000e+00> : vector<8x8x8xf32>
    %33 = tpu.matmul %14, %23, %cst_5 {dimension_numbers = #tpu.dot_dimension_numbers<[2], [2], [1], [1], [0, 0, 0, 1, 1, 1], [0], [0]>} : vector<8x8x8xf32>, vector<8x8x8xf32>, vector<8x8x8xf32> -> vector<8x8x8xf32>
    "tpu.trace_stop"() : () -> ()
    %cst_6 = arith.constant dense<0xFF800000> : vector<8x8xf32>
    %34 = vector.multi_reduction <maximumf>, %33, %cst_6 [2] : vector<8x8x8xf32> to vector<8x8xf32>
    %35 = vector.shape_cast %34 : vector<8x8xf32> to vector<8x8x1xf32>
    %36 = vector.broadcast %35 : vector<8x8x1xf32> to vector<8x8x8xf32>
    %37 = arith.subf %33, %36 : vector<8x8x8xf32>
    %38 = math.exp %37 : vector<8x8x8xf32>
    %cst_7 = arith.constant dense<0.000000e+00> : vector<8x8xf32>
    %39 = vector.multi_reduction <add>, %38, %cst_7 [2] : vector<8x8x8xf32> to vector<8x8xf32>
    %40 = vector.shape_cast %39 : vector<8x8xf32> to vector<8x8x1xf32>
    %41 = tpu.reciprocal %40 : vector<8x8x1xf32> -> vector<8x8x1xf32>
    %42 = vector.broadcast %41 : vector<8x8x1xf32> to vector<8x8x8xf32>
    %43 = arith.mulf %38, %42 : vector<8x8x8xf32>
    "tpu.trace_start"() <{level = 10 : i32, message = "bqk,bkd->bqd"}> : () -> ()
    %cst_8 = arith.constant dense<0.000000e+00> : vector<8x8x8xf32>
    %44 = tpu.matmul %43, %32, %cst_8 {dimension_numbers = #tpu.dot_dimension_numbers<[2], [1], [1], [2], [0, 0, 0, 1, 1, 2], [0], [0]>} : vector<8x8x8xf32>, vector<8x8x8xf32>, vector<8x8x8xf32> -> vector<8x8x8xf32>
    %cst_9 = arith.constant 0.000000e+00 : f32
    "tpu.trace_stop"() : () -> ()
    %45 = vector.broadcast %cst_9 : f32 to vector<16x32xf32>
    %46 = vector.extract_strided_slice %44 {offsets = [0, 0, 0], sizes = [2, 8, 8], strides = [1, 1, 1]} : vector<8x8x8xf32> to vector<2x8x8xf32>
    %47 = vector.shape_cast %46 : vector<2x8x8xf32> to vector<16x8xf32>
    %c0_10 = arith.constant 0 : index
    %c0_11 = arith.constant 0 : index
    %48 = vector.load %arg2[%c0_10, %c0_11] : memref<32x32xf32, #tpu.memory_space<vmem>>, vector<8x32xf32>
    %cst_12 = arith.constant dense<0.000000e+00> : vector<16x32xf32>
    %49 = tpu.matmul %47, %48, %cst_12 {dimension_numbers = #tpu.dot_dimension_numbers<[1], [0], [0], [1], [0, 0, 1, 1], [], []>} : vector<16x8xf32>, vector<8x32xf32>, vector<16x32xf32> -> vector<16x32xf32>
    %50 = arith.addf %45, %49 : vector<16x32xf32>
    %51 = vector.extract_strided_slice %44 {offsets = [2, 0, 0], sizes = [2, 8, 8], strides = [1, 1, 1]} : vector<8x8x8xf32> to vector<2x8x8xf32>
    %52 = vector.shape_cast %51 : vector<2x8x8xf32> to vector<16x8xf32>
    %c8 = arith.constant 8 : index
    %c0_13 = arith.constant 0 : index
    %53 = vector.load %arg2[%c8, %c0_13] : memref<32x32xf32, #tpu.memory_space<vmem>>, vector<8x32xf32>
    %cst_14 = arith.constant dense<0.000000e+00> : vector<16x32xf32>
    %54 = tpu.matmul %52, %53, %cst_14 {dimension_numbers = #tpu.dot_dimension_numbers<[1], [0], [0], [1], [0, 0, 1, 1], [], []>} : vector<16x8xf32>, vector<8x32xf32>, vector<16x32xf32> -> vector<16x32xf32>
    %55 = arith.addf %50, %54 : vector<16x32xf32>
    %56 = vector.extract_strided_slice %44 {offsets = [4, 0, 0], sizes = [2, 8, 8], strides = [1, 1, 1]} : vector<8x8x8xf32> to vector<2x8x8xf32>
    %57 = vector.shape_cast %56 : vector<2x8x8xf32> to vector<16x8xf32>
    %c16 = arith.constant 16 : index
    %c0_15 = arith.constant 0 : index
    %58 = vector.load %arg2[%c16, %c0_15] : memref<32x32xf32, #tpu.memory_space<vmem>>, vector<8x32xf32>
    %cst_16 = arith.constant dense<0.000000e+00> : vector<16x32xf32>
    %59 = tpu.matmul %57, %58, %cst_16 {dimension_numbers = #tpu.dot_dimension_numbers<[1], [0], [0], [1], [0, 0, 1, 1], [], []>} : vector<16x8xf32>, vector<8x32xf32>, vector<16x32xf32> -> vector<16x32xf32>
    %60 = arith.addf %55, %59 : vector<16x32xf32>
    %61 = vector.extract_strided_slice %44 {offsets = [6, 0, 0], sizes = [2, 8, 8], strides = [1, 1, 1]} : vector<8x8x8xf32> to vector<2x8x8xf32>
    %62 = vector.shape_cast %61 : vector<2x8x8xf32> to vector<16x8xf32>
    %c24 = arith.constant 24 : index
    %c0_17 = arith.constant 0 : index
    %63 = vector.load %arg2[%c24, %c0_17] : memref<32x32xf32, #tpu.memory_space<vmem>>, vector<8x32xf32>
    %cst_18 = arith.constant dense<0.000000e+00> : vector<16x32xf32>
    %64 = tpu.matmul %62, %63, %cst_18 {dimension_numbers = #tpu.dot_dimension_numbers<[1], [0], [0], [1], [0, 0, 1, 1], [], []>} : vector<16x8xf32>, vector<8x32xf32>, vector<16x32xf32> -> vector<16x32xf32>
    %65 = arith.addf %60, %64 : vector<16x32xf32>
    %c1 = arith.constant 1 : index
    %c0_19 = arith.constant 0 : index
    %66 = vector.load %arg5[%c1, %c0_19] : memref<8x128xf32, #tpu.memory_space<vmem>>, vector<1x32xf32>
    %67 = vector.broadcast %66 : vector<1x32xf32> to vector<16x32xf32>
    %68 = arith.addf %65, %67 : vector<16x32xf32>
    %c2 = arith.constant 2 : index
    %c0_20 = arith.constant 0 : index
    %69 = vector.load %arg5[%c2, %c0_20] : memref<8x128xf32, #tpu.memory_space<vmem>>, vector<1x32xf32>
    %c3 = arith.constant 3 : index
    %c0_21 = arith.constant 0 : index
    %70 = vector.load %arg5[%c3, %c0_21] : memref<8x128xf32, #tpu.memory_space<vmem>>, vector<1x32xf32>
    %cst_22 = arith.constant dense<0.000000e+00> : vector<16xf32>
    %71 = vector.multi_reduction <add>, %68, %cst_22 [1] : vector<16x32xf32> to vector<16xf32>
    %72 = vector.shape_cast %71 : vector<16xf32> to vector<16x1xf32>
    %cst_23 = arith.constant 3.200000e+01 : f32
    %73 = vector.broadcast %cst_23 : f32 to vector<16x1xf32>
    %74 = arith.divf %72, %73 : vector<16x1xf32>
    %75 = arith.mulf %68, %68 : vector<16x32xf32>
    %cst_24 = arith.constant dense<0.000000e+00> : vector<16xf32>
    %76 = vector.multi_reduction <add>, %75, %cst_24 [1] : vector<16x32xf32> to vector<16xf32>
    %77 = vector.shape_cast %76 : vector<16xf32> to vector<16x1xf32>
    %cst_25 = arith.constant 3.200000e+01 : f32
    %78 = vector.broadcast %cst_25 : f32 to vector<16x1xf32>
    %79 = arith.divf %77, %78 : vector<16x1xf32>
    %80 = arith.mulf %74, %74 : vector<16x1xf32>
    %81 = arith.subf %79, %80 : vector<16x1xf32>
    %82 = vector.broadcast %74 : vector<16x1xf32> to vector<16x32xf32>
    %83 = arith.subf %68, %82 : vector<16x32xf32>
    %cst_26 = arith.constant 9.99999974E-6 : f32
    %84 = vector.broadcast %cst_26 : f32 to vector<16x1xf32>
    %85 = arith.addf %81, %84 : vector<16x1xf32>
    %86 = math.rsqrt %85 : vector<16x1xf32>
    %87 = vector.broadcast %86 : vector<16x1xf32> to vector<16x32xf32>
    %88 = arith.mulf %83, %87 : vector<16x32xf32>
    %89 = vector.broadcast %69 : vector<1x32xf32> to vector<16x32xf32>
    %90 = arith.mulf %88, %89 : vector<16x32xf32>
    %91 = vector.broadcast %70 : vector<1x32xf32> to vector<16x32xf32>
    %92 = arith.addf %90, %91 : vector<16x32xf32>
    %c0_27 = arith.constant 0 : index
    %c0_28 = arith.constant 0 : index
    %93 = vector.load %arg3[%c0_27, %c0_28] : memref<32x64xf32, #tpu.memory_space<vmem>>, vector<32x64xf32>
    %cst_29 = arith.constant dense<0.000000e+00> : vector<16x64xf32>
    %94 = tpu.matmul %92, %93, %cst_29 {dimension_numbers = #tpu.dot_dimension_numbers<[1], [0], [0], [1], [0, 0, 1, 1], [], []>} : vector<16x32xf32>, vector<32x64xf32>, vector<16x64xf32> -> vector<16x64xf32>
    %c4 = arith.constant 4 : index
    %c0_30 = arith.constant 0 : index
    %95 = vector.load %arg5[%c4, %c0_30] : memref<8x128xf32, #tpu.memory_space<vmem>>, vector<1x64xf32>
    %96 = vector.broadcast %95 : vector<1x64xf32> to vector<16x64xf32>
    %97 = arith.addf %94, %96 : vector<16x64xf32>
    %cst_31 = arith.constant 0.000000e+00 : f32
    %98 = vector.broadcast %cst_31 : f32 to vector<16x64xf32>
    %99 = arith.maximumf %97, %98 : vector<16x64xf32>
    %c0_32 = arith.constant 0 : index
    %c0_33 = arith.constant 0 : index
    %100 = vector.load %arg4[%c0_32, %c0_33] : memref<64x32xf32, #tpu.memory_space<vmem>>, vector<64x32xf32>
    %cst_34 = arith.constant dense<0.000000e+00> : vector<16x32xf32>
    %101 = tpu.matmul %99, %100, %cst_34 {dimension_numbers = #tpu.dot_dimension_numbers<[1], [0], [0], [1], [0, 0, 1, 1], [], []>} : vector<16x64xf32>, vector<64x32xf32>, vector<16x32xf32> -> vector<16x32xf32>
    %c5 = arith.constant 5 : index
    %c0_35 = arith.constant 0 : index
    %102 = vector.load %arg5[%c5, %c0_35] : memref<8x128xf32, #tpu.memory_space<vmem>>, vector<1x32xf32>
    %103 = vector.broadcast %102 : vector<1x32xf32> to vector<16x32xf32>
    %104 = arith.addf %101, %103 : vector<16x32xf32>
    %c6 = arith.constant 6 : index
    %c0_36 = arith.constant 0 : index
    %105 = vector.load %arg5[%c6, %c0_36] : memref<8x128xf32, #tpu.memory_space<vmem>>, vector<1x32xf32>
    %c7 = arith.constant 7 : index
    %c0_37 = arith.constant 0 : index
    %106 = vector.load %arg5[%c7, %c0_37] : memref<8x128xf32, #tpu.memory_space<vmem>>, vector<1x32xf32>
    %cst_38 = arith.constant dense<0.000000e+00> : vector<16xf32>
    %107 = vector.multi_reduction <add>, %104, %cst_38 [1] : vector<16x32xf32> to vector<16xf32>
    %108 = vector.shape_cast %107 : vector<16xf32> to vector<16x1xf32>
    %cst_39 = arith.constant 3.200000e+01 : f32
    %109 = vector.broadcast %cst_39 : f32 to vector<16x1xf32>
    %110 = arith.divf %108, %109 : vector<16x1xf32>
    %111 = arith.mulf %104, %104 : vector<16x32xf32>
    %cst_40 = arith.constant dense<0.000000e+00> : vector<16xf32>
    %112 = vector.multi_reduction <add>, %111, %cst_40 [1] : vector<16x32xf32> to vector<16xf32>
    %113 = vector.shape_cast %112 : vector<16xf32> to vector<16x1xf32>
    %cst_41 = arith.constant 3.200000e+01 : f32
    %114 = vector.broadcast %cst_41 : f32 to vector<16x1xf32>
    %115 = arith.divf %113, %114 : vector<16x1xf32>
    %116 = arith.mulf %110, %110 : vector<16x1xf32>
    %117 = arith.subf %115, %116 : vector<16x1xf32>
    %118 = vector.broadcast %110 : vector<16x1xf32> to vector<16x32xf32>
    %119 = arith.subf %104, %118 : vector<16x32xf32>
    %cst_42 = arith.constant 9.99999974E-6 : f32
    %120 = vector.broadcast %cst_42 : f32 to vector<16x1xf32>
    %121 = arith.addf %117, %120 : vector<16x1xf32>
    %122 = math.rsqrt %121 : vector<16x1xf32>
    %123 = vector.broadcast %122 : vector<16x1xf32> to vector<16x32xf32>
    %124 = arith.mulf %119, %123 : vector<16x32xf32>
    %125 = vector.broadcast %105 : vector<1x32xf32> to vector<16x32xf32>
    %126 = arith.mulf %124, %125 : vector<16x32xf32>
    %127 = vector.broadcast %106 : vector<1x32xf32> to vector<16x32xf32>
    %128 = arith.addf %126, %127 : vector<16x32xf32>
    %c0_43 = arith.constant 0 : index
    %c0_44 = arith.constant 0 : index
    %129 = vector.load %arg6[%c0_43, %c0_44] : memref<16x32xf32, #tpu.memory_space<vmem>>, vector<16x32xf32>
    tpu.vector_store %arg6[%c0_43, %c0_44], %128 {strides = array<i32>} : memref<16x32xf32, #tpu.memory_space<vmem>>, vector<16x32xf32>,
    return
  }
}

</mosaic_0001>

<llo_original>
// kernel: pc_transformer_block.1
$region0: #{pc_transformer_block.1}
  #allocation0 [shape = 'u32[]', space=smem, size = 0x4, offset = 0x4, fixed_abs, tag = 'smem constant byte address 0x4 - core index']
  #allocation1 [shape = 'u32[144,128]{1,0:T(1,128)}', space=vmem, size = 0x12000, scoped, tag = 'internal scratch']
  %s0 = inlined_call_operand.hbm [shape: f32[16,32], index: 0, kind: input, shape index: {}]
  %s1 = inlined_call_operand.vmem [shape: f32[32,128], index: 1, kind: input, shape index: {}]
  %s2 = inlined_call_operand.vmem [shape: f32[32,32], index: 2, kind: input, shape index: {}]
  %s3 = inlined_call_operand.vmem [shape: f32[32,64], index: 3, kind: input, shape index: {}]
  %s4 = inlined_call_operand.vmem [shape: f32[64,32], index: 4, kind: input, shape index: {}]
  %s5 = inlined_call_operand.hbm [shape: f32[8,128], index: 5, kind: input, shape index: {}]
  %s6 = inlined_call_operand.hbm [shape: f32[16,32], index: 6, kind: output, shape index: {}]
  %s7 = sld [smem:[#allocation0]]
  $region42: #{pc_transformer_block.1} parent=0
    _
  %s9 = ssub.s32 1, %s7
  %s10 = scalar_select 0, %s9, %s7
  $region1: #{pc_transformer_block.1} parent=0
    #allocation2 [shape = 'u8[8192]{0}', space=vmem, size = 0x2000, scoped, tag = 'input window, operand 0, single buffered']
    #allocation3 [shape = 's32[1]{0}', space=sflag, size = 0x4, scoped, tag = 'scoped memory for pc_transformer_block.1']
    #allocation4 [shape = 's32[1]{0}', space=sflag, size = 0x4, scoped, tag = 'scoped memory for pc_transformer_block.1']
    #allocation5 [shape = 'u8[4096]{0}', space=vmem, size = 0x1000, scoped, tag = 'input window, operand 5, single buffered']
    #allocation6 [shape = 's32[1]{0}', space=sflag, size = 0x4, scoped, tag = 'scoped memory for pc_transformer_block.1']
    #allocation7 [shape = 'u8[8192]{0}', space=vmem, size = 0x2000, scoped, tag = 'output window, operand 0, single buffered']
    %11 = vsyncpa [#allocation3], 0
    %12 = vsyncpa [#allocation6], 0
    %13 = vsyncpa [#allocation4], 0
    // Predicated region
    $region2: #{pc_transformer_block.1} parent=1 // pred_check
      _
    $region3: #{pc_transformer_block.1} parent=1 // pred_check_branch
      %15 = sbr.rel (0) target = $region5
    $region4: #{pc_transformer_block.1} parent=1 // pred_region
      %s17 = ssub.s32 256, 256
      %18 = vsyncadd [#allocation3], %s17
      %s19 = sshll.u32 [#allocation2], 4
      %s20 = int_to_ptr.vmem [resolvable:$true] %s19
      %25 = dma.hbm_to_vmem [thread:$0]  %s0, 256, %s20, [#allocation3], 128, 128, 8
    $region5: #{pc_transformer_block.1} parent=1 // pred_fallthru
      _
    // Predicated region
    $region6: #{pc_transformer_block.1} parent=1 // pred_check
      _
    $region7: #{pc_transformer_block.1} parent=1 // pred_check_branch
      %27 = sbr.rel (0) target = $region9
    $region8: #{pc_transformer_block.1} parent=1 // pred_region
      _
    $region9: #{pc_transformer_block.1} parent=1 // pred_fallthru
      _
    // Predicated region
    $region10: #{pc_transformer_block.1} parent=1 // pred_check
      _
    $region11: #{pc_transformer_block.1} parent=1 // pred_check_branch
      %29 = sbr.rel (0) target = $region13
    $region12: #{pc_transformer_block.1} parent=1 // pred_region
      _
    $region13: #{pc_transformer_block.1} parent=1 // pred_fallthru
      _
    // Predicated region
    $region14: #{pc_transformer_block.1} parent=1 // pred_check
      _
    $region15: #{pc_transformer_block.1} parent=1 // pred_check_branch
      %31 = sbr.rel (0) target = $region17
    $region16: #{pc_transformer_block.1} parent=1 // pred_region
      _
    $region17: #{pc_transformer_block.1} parent=1 // pred_fallthru
      _
    // Predicated region
    $region18: #{pc_transformer_block.1} parent=1 // pred_check
      _
    $region19: #{pc_transformer_block.1} parent=1 // pred_check_branch
      %33 = sbr.rel (0) target = $region21
    $region20: #{pc_transformer_block.1} parent=1 // pred_region
      _
    $region21: #{pc_transformer_block.1} parent=1 // pred_fallthru
      _
    // Predicated region
    $region22: #{pc_transformer_block.1} parent=1 // pred_check
      _
    $region23: #{pc_transformer_block.1} parent=1 // pred_check_branch
      %35 = sbr.rel (0) target = $region25
    $region24: #{pc_transformer_block.1} parent=1 // pred_region
      %s37 = ssub.s32 128, 128
      %38 = vsyncadd [#allocation6], %s37
      %s40 = sshll.u32 [#allocation5], 4
      %s41 = int_to_ptr.vmem [resolvable:$true] %s40
      %43 = dma.hbm_to_vmem [thread:$0]  %s5, 128, %s41, [#allocation6]
    $region25: #{pc_transformer_block.1} parent=1 // pred_fallthru
      _
    // Predicated region
    $region26: #{pc_transformer_block.1} parent=1 // pred_check
      _
    $region27: #{pc_transformer_block.1} parent=1 // pred_check_branch
      %45 = sbr.rel (0) target = $region29
    $region28: #{pc_transformer_block.1} parent=1 // pred_region
      %46 = dma.done [#allocation3], 256
    $region29: #{pc_transformer_block.1} parent=1 // pred_fallthru
      _
    // Predicated region
    $region30: #{pc_transformer_block.1} parent=1 // pred_check
      _
    $region31: #{pc_transformer_block.1} parent=1 // pred_check_branch
      %48 = sbr.rel (0) target = $region33
    $region32: #{pc_transformer_block.1} parent=1 // pred_region
      %49 = dma.done [#allocation6], 128
    $region33: #{pc_transformer_block.1} parent=1 // pred_fallthru
      _
    %v50 = vld [vmem:[#allocation2] sm:$0xff]
    %v51 = vld [vmem:[#allocation2 + $0x8] sm:$0xff]
    %v52 = vld [vmem:[%s1] sm:$0xff]
    %v53 = vld [vmem:[%s1 + $0x8] sm:$0xff]
    %v54 = vld [vmem:[%s1 + $0x10] sm:$0xff]
    %v55 = vld [vmem:[%s1 + $0x18] sm:$0xff]
    %v56 = vld [vmem:[#allocation5] sm:$0x1]
    %v57 = vlaneseq
    %v58 = vshrl.u32 %v57, 7
    %v59 = vsub.s32 0, %v58
    %v60 = vrot.slane %v56, %v59
    %vm61 = vcmask 261120
    %v63 = vsel %vm61, %v50, 0
    %v66 = vsel %vm61, %v51, 0
    %68 = vmatprep.subr.mxu0 0.0
    %69 = vmatpush1.msra.mxu0 0.0
    %70 = vmatprep.subr.mxu0 0.0
    %71 = vmatpush1.msra.mxu0 0.0
    %72 = vmatprep.subr.mxu0 0.0
    %73 = vmatpush1.msra.mxu0 0.0
    %74 = vmatprep.subr.mxu0 0.0
    %75 = vmatpush1.msra.mxu0 0.0
    %76 = vmatprep.subr.mxu0 0.0
    %77 = vmatpush1.msra.mxu0 0.0
    %78 = vmatprep.subr.mxu0 0.0
    %79 = vmatpush1.msra.mxu0 0.0
    %80 = vmatprep.subr.mxu0 0.0
    %81 = vmatpush1.msra.mxu0 0.0
    %82 = vmatprep.subr.mxu0 0.0
    %83 = vmatpush1.msra.mxu0 0.0
    %84 = vmatprep.subr.mxu0 0.0
    %85 = vmatpush1.msra.mxu0 0.0
    %86 = vmatprep.subr.mxu0 0.0
    %87 = vmatpush1.msra.mxu0 0.0
    %88 = vmatprep.subr.mxu0 0.0
    %89 = vmatpush1.msra.mxu0 0.0
    %90 = vmatprep.subr.mxu0 0.0
    %91 = vmatpush1.msra.mxu0 0.0
    %92 = vmatprep.subr.mxu0 0.0
    %93 = vmatpush1.msra.mxu0 %v55
    %94 = vmatprep.subr.mxu0 0.0
    %95 = vmatpush1.msra.mxu0 %v54
    %96 = vmatprep.subr.mxu0 0.0
    %97 = vmatpush1.msra.mxu0 %v53
    %98 = vmatprep.subr.mxu0 0.0
    %99 = vmatpush1.msra.mxu0 %v52
    %100 = vmatprep.subr.mxu0 0.0
    %101 = vmatpush2.msra.mxu0 0.0
    %102 = vmatprep.subr.mxu0 0.0
    %103 = vmatpush2.msra.mxu0 0.0
    %104 = vmatprep.subr.mxu0 0.0
    %105 = vmatpush2.msra.mxu0 0.0
    %106 = vmatprep.subr.mxu0 0.0
    %107 = vmatpush2.msra.mxu0 0.0
    %108 = vmatprep.subr.mxu0 0.0
    %109 = vmatpush2.msra.mxu0 0.0
    %110 = vmatprep.subr.mxu0 0.0
    %111 = vmatpush2.msra.mxu0 0.0
    %112 = vmatprep.subr.mxu0 0.0
    %113 = vmatpush2.msra.mxu0 0.0
    %114 = vmatprep.subr.mxu0 0.0
    %115 = vmatpush2.msra.mxu0 0.0
    %116 = vmatprep.subr.mxu0 0.0
    %117 = vmatpush2.msra.mxu0 0.0
    %118 = vmatprep.subr.mxu0 0.0
    %119 = vmatpush2.msra.mxu0 0.0
    %120 = vmatprep.subr.mxu0 0.0
    %121 = vmatpush2.msra.mxu0 0.0
    %122 = vmatprep.subr.mxu0 0.0
    %123 = vmatpush2.msra.mxu0 0.0
    %124 = vmatprep.subr.mxu0 0.0
    %125 = vmatpush2.msra.mxu0 0.0
    %126 = vmatprep.subr.mxu0 0.0
    %127 = vmatpush2.msra.mxu0 0.0
    %128 = vmatprep.subr.mxu0 0.0
    %129 = vmatpush2.msra.mxu0 0.0
    %130 = vmatprep.subr.mxu0 0.0
    %131 = vmatpush2.msra.mxu0 0.0
    %132 = vmatprep.mubr.f32.mxu0 0.0
    %133 = vmatmul.mubr.f32.gmra.mxu0 %v63
    %v134 = vpop.f32.mrf.mxu0
    %v135 = vadd.f32 %v60, %v134
    %v136 = vpop.f32.mrf.mxu0
    %137 = vmatprep.mubr.f32.mxu0 0.0
    %138 = vmatmul.mubr.f32.gmra.mxu0 %v66
    %v139 = vpop.f32.mrf.mxu0
    %v140 = vadd.f32 %v60, %v139
    %v141 = vpop.f32.mrf.mxu0
    %142 = vdwg.mxu0
    %145 = vrot.lane.b32.xlu0 %v135, 120
    %v146 = vpop.permute.xlu0 %145
    %147 = vrot.lane.b32.xlu0 %v140, 120
    %v148 = vpop.permute.xlu0 %147
    %149 = vrot.lane.b32.xlu0 %v135, 112
    %v150 = vpop.permute.xlu0 %149
    %151 = vrot.lane.b32.xlu0 %v140, 112
    %v152 = vpop.permute.xlu0 %151
    %153 = vrot.lane.b32.xlu0 %v135, 104
    %v154 = vpop.permute.xlu0 %153
    %155 = vrot.lane.b32.xlu0 %v140, 104
    %v156 = vpop.permute.xlu0 %155
    %157 = vrot.lane.b32.xlu0 %v135, 96
    %v158 = vpop.permute.xlu0 %157
    %vm159 = vcmask 64512
    %v160 = vsel %vm159, %v135, 0
    %v162 = vsel %vm159, %v158, 0
    %164 = vmatprep.subr.mxu0 0.0
    %165 = vmatpush1.xpose.msra.mxu0 0.0
    %166 = vmatprep.subr.mxu0 0.0
    %167 = vmatpush1.xpose.msra.mxu0 0.0
    %168 = vmatprep.subr.mxu0 0.0
    %169 = vmatpush1.xpose.msra.mxu0 0.0
    %170 = vmatprep.subr.mxu0 0.0
    %171 = vmatpush1.xpose.msra.mxu0 0.0
    %172 = vmatprep.subr.mxu0 0.0
    %173 = vmatpush1.xpose.msra.mxu0 0.0
    %174 = vmatprep.subr.mxu0 0.0
    %175 = vmatpush1.xpose.msra.mxu0 0.0
    %176 = vmatprep.subr.mxu0 0.0
    %177 = vmatpush1.xpose.msra.mxu0 0.0
    %178 = vmatprep.subr.mxu0 0.0
    %179 = vmatpush1.xpose.msra.mxu0 0.0
    %180 = vmatprep.subr.mxu0 0.0
    %181 = vmatpush1.xpose.msra.mxu0 0.0
    %182 = vmatprep.subr.mxu0 0.0
    %183 = vmatpush1.xpose.msra.mxu0 0.0
    %184 = vmatprep.subr.mxu0 0.0
    %185 = vmatpush1.xpose.msra.mxu0 0.0
    %186 = vmatprep.subr.mxu0 0.0
    %187 = vmatpush1.xpose.msra.mxu0 0.0
    %188 = vmatprep.subr.mxu0 0.0
    %189 = vmatpush1.xpose.msra.mxu0 0.0
    %190 = vmatprep.subr.mxu0 0.0
    %191 = vmatpush1.xpose.msra.mxu0 0.0
    %192 = vmatprep.subr.mxu0 0.0
    %193 = vmatpush1.xpose.msra.mxu0 0.0
    %194 = vmatprep.subr.mxu0 0.0
    %195 = vmatpush1.xpose.msra.mxu0 %v162
    %196 = vmatprep.subr.mxu0 0.0
    %197 = vmatpush2.xpose.msra.mxu0 0.0
    %198 = vmatprep.subr.mxu0 0.0
    %199 = vmatpush2.xpose.msra.mxu0 0.0
    %200 = vmatprep.subr.mxu0 0.0
    %201 = vmatpush2.xpose.msra.mxu0 0.0
    %202 = vmatprep.subr.mxu0 0.0
    %203 = vmatpush2.xpose.msra.mxu0 0.0
    %204 = vmatprep.subr.mxu0 0.0
    %205 = vmatpush2.xpose.msra.mxu0 0.0
    %206 = vmatprep.subr.mxu0 0.0
    %207 = vmatpush2.xpose.msra.mxu0 0.0
    %208 = vmatprep.subr.mxu0 0.0
    %209 = vmatpush2.xpose.msra.mxu0 0.0
    %210 = vmatprep.subr.mxu0 0.0
    %211 = vmatpush2.xpose.msra.mxu0 0.0
    %212 = vmatprep.subr.mxu0 0.0
    %213 = vmatpush2.xpose.msra.mxu0 0.0
    %214 = vmatprep.subr.mxu0 0.0
    %215 = vmatpush2.xpose.msra.mxu0 0.0
    %216 = vmatprep.subr.mxu0 0.0
    %217 = vmatpush2.xpose.msra.mxu0 0.0
    %218 = vmatprep.subr.mxu0 0.0
    %219 = vmatpush2.xpose.msra.mxu0 0.0
    %220 = vmatprep.subr.mxu0 0.0
    %221 = vmatpush2.xpose.msra.mxu0 0.0
    %222 = vmatprep.subr.mxu0 0.0
    %223 = vmatpush2.xpose.msra.mxu0 0.0
    %224 = vmatprep.subr.mxu0 0.0
    %225 = vmatpush2.xpose.msra.mxu0 0.0
    %226 = vmatprep.subr.mxu0 0.0
    %227 = vmatpush2.xpose.msra.mxu0 0.0
    %228 = vmatprep.mubr.f32.mxu0 0.0
    %229 = vmatmul.mubr.f32.gmra.mxu0 %v160
    %v230 = vpop.f32.mrf.mxu0
    %v231 = vadd.f32 0.0, %v230
    %v232 = vpop.f32.mrf.mxu0
    %233 = vdwg.mxu0
    %234 = vrot.lane.b32.xlu0 %v140, 96
    %v235 = vpop.permute.xlu0 %234
    %v236 = vsel %vm159, %v140, 0
    %v238 = vsel %vm159, %v235, 0
    %240 = vmatprep.subr.mxu0 0.0
    %241 = vmatpush1.xpose.msra.mxu0 0.0
    %242 = vmatprep.subr.mxu0 0.0
    %243 = vmatpush1.xpose.msra.mxu0 0.0
    %244 = vmatprep.subr.mxu0 0.0
    %245 = vmatpush1.xpose.msra.mxu0 0.0
    %246 = vmatprep.subr.mxu0 0.0
    %247 = vmatpush1.xpose.msra.mxu0 0.0
    %248 = vmatprep.subr.mxu0 0.0
    %249 = vmatpush1.xpose.msra.mxu0 0.0
    %250 = vmatprep.subr.mxu0 0.0
    %251 = vmatpush1.xpose.msra.mxu0 0.0
    %252 = vmatprep.subr.mxu0 0.0
    %253 = vmatpush1.xpose.msra.mxu0 0.0
    %254 = vmatprep.subr.mxu0 0.0
    %255 = vmatpush1.xpose.msra.mxu0 0.0
    %256 = vmatprep.subr.mxu0 0.0
    %257 = vmatpush1.xpose.msra.mxu0 0.0
    %258 = vmatprep.subr.mxu0 0.0
    %259 = vmatpush1.xpose.msra.mxu0 0.0
    %260 = vmatprep.subr.mxu0 0.0
    %261 = vmatpush1.xpose.msra.mxu0 0.0
    %262 = vmatprep.subr.mxu0 0.0
    %263 = vmatpush1.xpose.msra.mxu0 0.0
    %264 = vmatprep.subr.mxu0 0.0
    %265 = vmatpush1.xpose.msra.mxu0 0.0
    %266 = vmatprep.subr.mxu0 0.0
    %267 = vmatpush1.xpose.msra.mxu0 0.0
    %268 = vmatprep.subr.mxu0 0.0
    %269 = vmatpush1.xpose.msra.mxu0 0.0
    %270 = vmatprep.subr.mxu0 0.0
    %271 = vmatpush1.xpose.msra.mxu0 %v238
    %272 = vmatprep.subr.mxu0 0.0
    %273 = vmatpush2.xpose.msra.mxu0 0.0
    %274 = vmatprep.subr.mxu0 0.0
    %275 = vmatpush2.xpose.msra.mxu0 0.0
    %276 = vmatprep.subr.mxu0 0.0
    %277 = vmatpush2.xpose.msra.mxu0 0.0
    %278 = vmatprep.subr.mxu0 0.0
    %279 = vmatpush2.xpose.msra.mxu0 0.0
    %280 = vmatprep.subr.mxu0 0.0
    %281 = vmatpush2.xpose.msra.mxu0 0.0
    %282 = vmatprep.subr.mxu0 0.0
    %283 = vmatpush2.xpose.msra.mxu0 0.0
    %284 = vmatprep.subr.mxu0 0.0
    %285 = vmatpush2.xpose.msra.mxu0 0.0
    %286 = vmatprep.subr.mxu0 0.0
    %287 = vmatpush2.xpose.msra.mxu0 0.0
    %288 = vmatprep.subr.mxu0 0.0
    %289 = vmatpush2.xpose.msra.mxu0 0.0
    %290 = vmatprep.subr.mxu0 0.0
    %291 = vmatpush2.xpose.msra.mxu0 0.0
    %292 = vmatprep.subr.mxu0 0.0
    %293 = vmatpush2.xpose.msra.mxu0 0.0
    %294 = vmatprep.subr.mxu0 0.0
    %295 = vmatpush2.xpose.msra.mxu0 0.0
    %296 = vmatprep.subr.mxu0 0.0
    %297 = vmatpush2.xpose.msra.mxu0 0.0
    %298 = vmatprep.subr.mxu0 0.0
    %299 = vmatpush2.xpose.msra.mxu0 0.0
    %300 = vmatprep.subr.mxu0 0.0
    %301 = vmatpush2.xpose.msra.mxu0 0.0
    %302 = vmatprep.subr.mxu0 0.0
    %303 = vmatpush2.xpose.msra.mxu0 0.0
    %304 = vmatprep.mubr.f32.mxu0 0.0
    %305 = vmatmul.mubr.f32.gmra.mxu0 %v236
    %v306 = vpop.f32.mrf.mxu0
    %v307 = vadd.f32 0.0, %v306
    %v308 = vpop.f32.mrf.mxu0
    %309 = vdwg.mxu0
    %310 = vrot.lane.b32.xlu0 %v146, 96
    %v311 = vpop.permute.xlu0 %310
    %v312 = vsel %vm159, %v146, 0
    %v314 = vsel %vm159, %v311, 0
    %316 = vmatprep.subr.mxu0 0.0
    %317 = vmatpush1.xpose.msra.mxu0 0.0
    %318 = vmatprep.subr.mxu0 0.0
    %319 = vmatpush1.xpose.msra.mxu0 0.0
    %320 = vmatprep.subr.mxu0 0.0
    %321 = vmatpush1.xpose.msra.mxu0 0.0
    %322 = vmatprep.subr.mxu0 0.0
    %323 = vmatpush1.xpose.msra.mxu0 0.0
    %324 = vmatprep.subr.mxu0 0.0
    %325 = vmatpush1.xpose.msra.mxu0 0.0
    %326 = vmatprep.subr.mxu0 0.0
    %327 = vmatpush1.xpose.msra.mxu0 0.0
    %328 = vmatprep.subr.mxu0 0.0
    %329 = vmatpush1.xpose.msra.mxu0 0.0
    %330 = vmatprep.subr.mxu0 0.0
    %331 = vmatpush1.xpose.msra.mxu0 0.0
    %332 = vmatprep.subr.mxu0 0.0
    %333 = vmatpush1.xpose.msra.mxu0 0.0
    %334 = vmatprep.subr.mxu0 0.0
    %335 = vmatpush1.xpose.msra.mxu0 0.0
    %336 = vmatprep.subr.mxu0 0.0
    %337 = vmatpush1.xpose.msra.mxu0 0.0
    %338 = vmatprep.subr.mxu0 0.0
    %339 = vmatpush1.xpose.msra.mxu0 0.0
    %340 = vmatprep.subr.mxu0 0.0
    %341 = vmatpush1.xpose.msra.mxu0 0.0
    %342 = vmatprep.subr.mxu0 0.0
    %343 = vmatpush1.xpose.msra.mxu0 0.0
    %344 = vmatprep.subr.mxu0 0.0
    %345 = vmatpush1.xpose.msra.mxu0 0.0
    %346 = vmatprep.subr.mxu0 0.0
    %347 = vmatpush1.xpose.msra.mxu0 %v314
    %348 = vmatprep.subr.mxu0 0.0
    %349 = vmatpush2.xpose.msra.mxu0 0.0
    %350 = vmatprep.subr.mxu0 0.0
    %351 = vmatpush2.xpose.msra.mxu0 0.0
    %352 = vmatprep.subr.mxu0 0.0
    %353 = vmatpush2.xpose.msra.mxu0 0.0
    %354 = vmatprep.subr.mxu0 0.0
    %355 = vmatpush2.xpose.msra.mxu0 0.0
    %356 = vmatprep.subr.mxu0 0.0
    %357 = vmatpush2.xpose.msra.mxu0 0.0
    %358 = vmatprep.subr.mxu0 0.0
    %359 = vmatpush2.xpose.msra.mxu0 0.0
    %360 = vmatprep.subr.mxu0 0.0
    %361 = vmatpush2.xpose.msra.mxu0 0.0
    %362 = vmatprep.subr.mxu0 0.0
    %363 = vmatpush2.xpose.msra.mxu0 0.0
    %364 = vmatprep.subr.mxu0 0.0
    %365 = vmatpush2.xpose.msra.mxu0 0.0
    %366 = vmatprep.subr.mxu0 0.0
    %367 = vmatpush2.xpose.msra.mxu0 0.0
    %368 = vmatprep.subr.mxu0 0.0
    %369 = vmatpush2.xpose.msra.mxu0 0.0
    %370 = vmatprep.subr.mxu0 0.0
    %371 = vmatpush2.xpose.msra.mxu0 0.0
    %372 = vmatprep.subr.mxu0 0.0
    %373 = vmatpush2.xpose.msra.mxu0 0.0
    %374 = vmatprep.subr.mxu0 0.0
    %375 = vmatpush2.xpose.msra.mxu0 0.0
    %376 = vmatprep.subr.mxu0 0.0
    %377 = vmatpush2.xpose.msra.mxu0 0.0
    %378 = vmatprep.subr.mxu0 0.0
    %379 = vmatpush2.xpose.msra.mxu0 0.0
    %380 = vmatprep.mubr.f32.mxu0 0.0
    %381 = vmatmul.mubr.f32.gmra.mxu0 %v312
    %v382 = vpop.f32.mrf.mxu0
    %v383 = vadd.f32 0.0, %v382
    %v384 = vpop.f32.mrf.mxu0
    %385 = vdwg.mxu0
    %386 = vrot.lane.b32.xlu0 %v148, 96
    %v387 = vpop.permute.xlu0 %386
    %v388 = vsel %vm159, %v148, 0
    %v390 = vsel %vm159, %v387, 0
    %392 = vmatprep.subr.mxu0 0.0
    %393 = vmatpush1.xpose.msra.mxu0 0.0
    %394 = vmatprep.subr.mxu0 0.0
    %395 = vmatpush1.xpose.msra.mxu0 0.0
    %396 = vmatprep.subr.mxu0 0.0
    %397 = vmatpush1.xpose.msra.mxu0 0.0
    %398 = vmatprep.subr.mxu0 0.0
    %399 = vmatpush1.xpose.msra.mxu0 0.0
    %400 = vmatprep.subr.mxu0 0.0
    %401 = vmatpush1.xpose.msra.mxu0 0.0
    %402 = vmatprep.subr.mxu0 0.0
    %403 = vmatpush1.xpose.msra.mxu0 0.0
    %404 = vmatprep.subr.mxu0 0.0
    %405 = vmatpush1.xpose.msra.mxu0 0.0
    %406 = vmatprep.subr.mxu0 0.0
    %407 = vmatpush1.xpose.msra.mxu0 0.0
    %408 = vmatprep.subr.mxu0 0.0
    %409 = vmatpush1.xpose.msra.mxu0 0.0
    %410 = vmatprep.subr.mxu0 0.0
    %411 = vmatpush1.xpose.msra.mxu0 0.0
    %412 = vmatprep.subr.mxu0 0.0
    %413 = vmatpush1.xpose.msra.mxu0 0.0
    %414 = vmatprep.subr.mxu0 0.0
    %415 = vmatpush1.xpose.msra.mxu0 0.0
    %416 = vmatprep.subr.mxu0 0.0
    %417 = vmatpush1.xpose.msra.mxu0 0.0
    %418 = vmatprep.subr.mxu0 0.0
    %419 = vmatpush1.xpose.msra.mxu0 0.0
    %420 = vmatprep.subr.mxu0 0.0
    %421 = vmatpush1.xpose.msra.mxu0 0.0
    %422 = vmatprep.subr.mxu0 0.0
    %423 = vmatpush1.xpose.msra.mxu0 %v390
    %424 = vmatprep.subr.mxu0 0.0
    %425 = vmatpush2.xpose.msra.mxu0 0.0
    %426 = vmatprep.subr.mxu0 0.0
    %427 = vmatpush2.xpose.msra.mxu0 0.0
    %428 = vmatprep.subr.mxu0 0.0
    %429 = vmatpush2.xpose.msra.mxu0 0.0
    %430 = vmatprep.subr.mxu0 0.0
    %431 = vmatpush2.xpose.msra.mxu0 0.0
    %432 = vmatprep.subr.mxu0 0.0
    %433 = vmatpush2.xpose.msra.mxu0 0.0
    %434 = vmatprep.subr.mxu0 0.0
    %435 = vmatpush2.xpose.msra.mxu0 0.0
    %436 = vmatprep.subr.mxu0 0.0
    %437 = vmatpush2.xpose.msra.mxu0 0.0
    %438 = vmatprep.subr.mxu0 0.0
    %439 = vmatpush2.xpose.msra.mxu0 0.0
    %440 = vmatprep.subr.mxu0 0.0
    %441 = vmatpush2.xpose.msra.mxu0 0.0
    %442 = vmatprep.subr.mxu0 0.0
    %443 = vmatpush2.xpose.msra.mxu0 0.0
    %444 = vmatprep.subr.mxu0 0.0
    %445 = vmatpush2.xpose.msra.mxu0 0.0
    %446 = vmatprep.subr.mxu0 0.0
    %447 = vmatpush2.xpose.msra.mxu0 0.0
    %448 = vmatprep.subr.mxu0 0.0
    %449 = vmatpush2.xpose.msra.mxu0 0.0
    %450 = vmatprep.subr.mxu0 0.0
    %451 = vmatpush2.xpose.msra.mxu0 0.0
    %452 = vmatprep.subr.mxu0 0.0
    %453 = vmatpush2.xpose.msra.mxu0 0.0
    %454 = vmatprep.subr.mxu0 0.0
    %455 = vmatpush2.xpose.msra.mxu0 0.0
    %456 = vmatprep.mubr.f32.mxu0 0.0
    %457 = vmatmul.mubr.f32.gmra.mxu0 %v388
    %v458 = vpop.f32.mrf.mxu0
    %v459 = vadd.f32 0.0, %v458
    %v460 = vpop.f32.mrf.mxu0
    %461 = vdwg.mxu0
    %462 = vrot.lane.b32.xlu0 %v150, 96
    %v463 = vpop.permute.xlu0 %462
    %v464 = vsel %vm159, %v150, 0
    %v466 = vsel %vm159, %v463, 0
    %468 = vmatprep.subr.mxu0 0.0
    %469 = vmatpush1.xpose.msra.mxu0 0.0
    %470 = vmatprep.subr.mxu0 0.0
    %471 = vmatpush1.xpose.msra.mxu0 0.0
    %472 = vmatprep.subr.mxu0 0.0
    %473 = vmatpush1.xpose.msra.mxu0 0.0
    %474 = vmatprep.subr.mxu0 0.0
    %475 = vmatpush1.xpose.msra.mxu0 0.0
    %476 = vmatprep.subr.mxu0 0.0
    %477 = vmatpush1.xpose.msra.mxu0 0.0
    %478 = vmatprep.subr.mxu0 0.0
    %479 = vmatpush1.xpose.msra.mxu0 0.0
    %480 = vmatprep.subr.mxu0 0.0
    %481 = vmatpush1.xpose.msra.mxu0 0.0
    %482 = vmatprep.subr.mxu0 0.0
    %483 = vmatpush1.xpose.msra.mxu0 0.0
    %484 = vmatprep.subr.mxu0 0.0
    %485 = vmatpush1.xpose.msra.mxu0 0.0
    %486 = vmatprep.subr.mxu0 0.0
    %487 = vmatpush1.xpose.msra.mxu0 0.0
    %488 = vmatprep.subr.mxu0 0.0
    %489 = vmatpush1.xpose.msra.mxu0 0.0
    %490 = vmatprep.subr.mxu0 0.0
    %491 = vmatpush1.xpose.msra.mxu0 0.0
    %492 = vmatprep.subr.mxu0 0.0
    %493 = vmatpush1.xpose.msra.mxu0 0.0
    %494 = vmatprep.subr.mxu0 0.0
    %495 = vmatpush1.xpose.msra.mxu0 0.0
    %496 = vmatprep.subr.mxu0 0.0
    %497 = vmatpush1.xpose.msra.mxu0 0.0
    %498 = vmatprep.subr.mxu0 0.0
    %499 = vmatpush1.xpose.msra.mxu0 %v466
    %500 = vmatprep.subr.mxu0 0.0
    %501 = vmatpush2.xpose.msra.mxu0 0.0
    %502 = vmatprep.subr.mxu0 0.0
    %503 = vmatpush2.xpose.msra.mxu0 0.0
    %504 = vmatprep.subr.mxu0 0.0
    %505 = vmatpush2.xpose.msra.mxu0 0.0
    %506 = vmatprep.subr.mxu0 0.0
    %507 = vmatpush2.xpose.msra.mxu0 0.0
    %508 = vmatprep.subr.mxu0 0.0
    %509 = vmatpush2.xpose.msra.mxu0 0.0
    %510 = vmatprep.subr.mxu0 0.0
    %511 = vmatpush2.xpose.msra.mxu0 0.0
    %512 = vmatprep.subr.mxu0 0.0
    %513 = vmatpush2.xpose.msra.mxu0 0.0
    %514 = vmatprep.subr.mxu0 0.0
    %515 = vmatpush2.xpose.msra.mxu0 0.0
    %516 = vmatprep.subr.mxu0 0.0
    %517 = vmatpush2.xpose.msra.mxu0 0.0
    %518 = vmatprep.subr.mxu0 0.0
    %519 = vmatpush2.xpose.msra.mxu0 0.0
    %520 = vmatprep.subr.mxu0 0.0
    %521 = vmatpush2.xpose.msra.mxu0 0.0
    %522 = vmatprep.subr.mxu0 0.0
    %523 = vmatpush2.xpose.msra.mxu0 0.0
    %524 = vmatprep.subr.mxu0 0.0
    %525 = vmatpush2.xpose.msra.mxu0 0.0
    %526 = vmatprep.subr.mxu0 0.0
    %527 = vmatpush2.xpose.msra.mxu0 0.0
    %528 = vmatprep.subr.mxu0 0.0
    %529 = vmatpush2.xpose.msra.mxu0 0.0
    %530 = vmatprep.subr.mxu0 0.0
    %531 = vmatpush2.xpose.msra.mxu0 0.0
    %532 = vmatprep.mubr.f32.mxu0 0.0
    %533 = vmatmul.mubr.f32.gmra.mxu0 %v464
    %v534 = vpop.f32.mrf.mxu0
    %v535 = vadd.f32 0.0, %v534
    %v536 = vpop.f32.mrf.mxu0
    %537 = vdwg.mxu0
    %538 = vrot.lane.b32.xlu0 %v152, 96
    %v539 = vpop.permute.xlu0 %538
    %v540 = vsel %vm159, %v152, 0
    %v542 = vsel %vm159, %v539, 0
    %544 = vmatprep.subr.mxu0 0.0
    %545 = vmatpush1.xpose.msra.mxu0 0.0
    %546 = vmatprep.subr.mxu0 0.0
    %547 = vmatpush1.xpose.msra.mxu0 0.0
    %548 = vmatprep.subr.mxu0 0.0
    %549 = vmatpush1.xpose.msra.mxu0 0.0
    %550 = vmatprep.subr.mxu0 0.0
    %551 = vmatpush1.xpose.msra.mxu0 0.0
    %552 = vmatprep.subr.mxu0 0.0
    %553 = vmatpush1.xpose.msra.mxu0 0.0
    %554 = vmatprep.subr.mxu0 0.0
    %555 = vmatpush1.xpose.msra.mxu0 0.0
    %556 = vmatprep.subr.mxu0 0.0
    %557 = vmatpush1.xpose.msra.mxu0 0.0
    %558 = vmatprep.subr.mxu0 0.0
    %559 = vmatpush1.xpose.msra.mxu0 0.0
    %560 = vmatprep.subr.mxu0 0.0
    %561 = vmatpush1.xpose.msra.mxu0 0.0
    %562 = vmatprep.subr.mxu0 0.0
    %563 = vmatpush1.xpose.msra.mxu0 0.0
    %564 = vmatprep.subr.mxu0 0.0
    %565 = vmatpush1.xpose.msra.mxu0 0.0
    %566 = vmatprep.subr.mxu0 0.0
    %567 = vmatpush1.xpose.msra.mxu0 0.0
    %568 = vmatprep.subr.mxu0 0.0
    %569 = vmatpush1.xpose.msra.mxu0 0.0
    %570 = vmatprep.subr.mxu0 0.0
    %571 = vmatpush1.xpose.msra.mxu0 0.0
    %572 = vmatprep.subr.mxu0 0.0
    %573 = vmatpush1.xpose.msra.mxu0 0.0
    %574 = vmatprep.subr.mxu0 0.0
    %575 = vmatpush1.xpose.msra.mxu0 %v542
    %576 = vmatprep.subr.mxu0 0.0
    %577 = vmatpush2.xpose.msra.mxu0 0.0
    %578 = vmatprep.subr.mxu0 0.0
    %579 = vmatpush2.xpose.msra.mxu0 0.0
    %580 = vmatprep.subr.mxu0 0.0
    %581 = vmatpush2.xpose.msra.mxu0 0.0
    %582 = vmatprep.subr.mxu0 0.0
    %583 = vmatpush2.xpose.msra.mxu0 0.0
    %584 = vmatprep.subr.mxu0 0.0
    %585 = vmatpush2.xpose.msra.mxu0 0.0
    %586 = vmatprep.subr.mxu0 0.0
    %587 = vmatpush2.xpose.msra.mxu0 0.0
    %588 = vmatprep.subr.mxu0 0.0
    %589 = vmatpush2.xpose.msra.mxu0 0.0
    %590 = vmatprep.subr.mxu0 0.0
    %591 = vmatpush2.xpose.msra.mxu0 0.0
    %592 = vmatprep.subr.mxu0 0.0
    %593 = vmatpush2.xpose.msra.mxu0 0.0
    %594 = vmatprep.subr.mxu0 0.0
    %595 = vmatpush2.xpose.msra.mxu0 0.0
    %596 = vmatprep.subr.mxu0 0.0
    %597 = vmatpush2.xpose.msra.mxu0 0.0
    %598 = vmatprep.subr.mxu0 0.0
    %599 = vmatpush2.xpose.msra.mxu0 0.0
    %600 = vmatprep.subr.mxu0 0.0
    %601 = vmatpush2.xpose.msra.mxu0 0.0
    %602 = vmatprep.subr.mxu0 0.0
    %603 = vmatpush2.xpose.msra.mxu0 0.0
    %604 = vmatprep.subr.mxu0 0.0
    %605 = vmatpush2.xpose.msra.mxu0 0.0
    %606 = vmatprep.subr.mxu0 0.0
    %607 = vmatpush2.xpose.msra.mxu0 0.0
    %608 = vmatprep.mubr.f32.mxu0 0.0
    %609 = vmatmul.mubr.f32.gmra.mxu0 %v540
    %v610 = vpop.f32.mrf.mxu0
    %v611 = vadd.f32 0.0, %v610
    %v612 = vpop.f32.mrf.mxu0
    %613 = vdwg.mxu0
    %614 = vrot.lane.b32.xlu0 %v154, 96
    %v615 = vpop.permute.xlu0 %614
    %v616 = vsel %vm159, %v154, 0
    %v618 = vsel %vm159, %v615, 0
    %620 = vmatprep.subr.mxu0 0.0
    %621 = vmatpush1.xpose.msra.mxu0 0.0
    %622 = vmatprep.subr.mxu0 0.0
    %623 = vmatpush1.xpose.msra.mxu0 0.0
    %624 = vmatprep.subr.mxu0 0.0
    %625 = vmatpush1.xpose.msra.mxu0 0.0
    %626 = vmatprep.subr.mxu0 0.0
    %627 = vmatpush1.xpose.msra.mxu0 0.0
    %628 = vmatprep.subr.mxu0 0.0
    %629 = vmatpush1.xpose.msra.mxu0 0.0
    %630 = vmatprep.subr.mxu0 0.0
    %631 = vmatpush1.xpose.msra.mxu0 0.0
    %632 = vmatprep.subr.mxu0 0.0
    %633 = vmatpush1.xpose.msra.mxu0 0.0
    %634 = vmatprep.subr.mxu0 0.0
    %635 = vmatpush1.xpose.msra.mxu0 0.0
    %636 = vmatprep.subr.mxu0 0.0
    %637 = vmatpush1.xpose.msra.mxu0 0.0
    %638 = vmatprep.subr.mxu0 0.0
    %639 = vmatpush1.xpose.msra.mxu0 0.0
    %640 = vmatprep.subr.mxu0 0.0
    %641 = vmatpush1.xpose.msra.mxu0 0.0
    %642 = vmatprep.subr.mxu0 0.0
    %643 = vmatpush1.xpose.msra.mxu0 0.0
    %644 = vmatprep.subr.mxu0 0.0
    %645 = vmatpush1.xpose.msra.mxu0 0.0
    %646 = vmatprep.subr.mxu0 0.0
    %647 = vmatpush1.xpose.msra.mxu0 0.0
    %648 = vmatprep.subr.mxu0 0.0
    %649 = vmatpush1.xpose.msra.mxu0 0.0
    %650 = vmatprep.subr.mxu0 0.0
    %651 = vmatpush1.xpose.msra.mxu0 %v618
    %652 = vmatprep.subr.mxu0 0.0
    %653 = vmatpush2.xpose.msra.mxu0 0.0
    %654 = vmatprep.subr.mxu0 0.0
    %655 = vmatpush2.xpose.msra.mxu0 0.0
    %656 = vmatprep.subr.mxu0 0.0
    %657 = vmatpush2.xpose.msra.mxu0 0.0
    %658 = vmatprep.subr.mxu0 0.0
    %659 = vmatpush2.xpose.msra.mxu0 0.0
    %660 = vmatprep.subr.mxu0 0.0
    %661 = vmatpush2.xpose.msra.mxu0 0.0
    %662 = vmatprep.subr.mxu0 0.0
    %663 = vmatpush2.xpose.msra.mxu0 0.0
    %664 = vmatprep.subr.mxu0 0.0
    %665 = vmatpush2.xpose.msra.mxu0 0.0
    %666 = vmatprep.subr.mxu0 0.0
    %667 = vmatpush2.xpose.msra.mxu0 0.0
    %668 = vmatprep.subr.mxu0 0.0
    %669 = vmatpush2.xpose.msra.mxu0 0.0
    %670 = vmatprep.subr.mxu0 0.0
    %671 = vmatpush2.xpose.msra.mxu0 0.0
    %672 = vmatprep.subr.mxu0 0.0
    %673 = vmatpush2.xpose.msra.mxu0 0.0
    %674 = vmatprep.subr.mxu0 0.0
    %675 = vmatpush2.xpose.msra.mxu0 0.0
    %676 = vmatprep.subr.mxu0 0.0
    %677 = vmatpush2.xpose.msra.mxu0 0.0
    %678 = vmatprep.subr.mxu0 0.0
    %679 = vmatpush2.xpose.msra.mxu0 0.0
    %680 = vmatprep.subr.mxu0 0.0
    %681 = vmatpush2.xpose.msra.mxu0 0.0
    %682 = vmatprep.subr.mxu0 0.0
    %683 = vmatpush2.xpose.msra.mxu0 0.0
    %684 = vmatprep.mubr.f32.mxu0 0.0
    %685 = vmatmul.mubr.f32.gmra.mxu0 %v616
    %v686 = vpop.f32.mrf.mxu0
    %v687 = vadd.f32 0.0, %v686
    %v688 = vpop.f32.mrf.mxu0
    %689 = vdwg.mxu0
    %690 = vrot.lane.b32.xlu0 %v156, 96
    %v691 = vpop.permute.xlu0 %690
    %v692 = vsel %vm159, %v156, 0
    %v694 = vsel %vm159, %v691, 0
    %696 = vmatprep.subr.mxu0 0.0
    %697 = vmatpush1.xpose.msra.mxu0 0.0
    %698 = vmatprep.subr.mxu0 0.0
    %699 = vmatpush1.xpose.msra.mxu0 0.0
    %700 = vmatprep.subr.mxu0 0.0
    %701 = vmatpush1.xpose.msra.mxu0 0.0
    %702 = vmatprep.subr.mxu0 0.0
    %703 = vmatpush1.xpose.msra.mxu0 0.0
    %704 = vmatprep.subr.mxu0 0.0
    %705 = vmatpush1.xpose.msra.mxu0 0.0
    %706 = vmatprep.subr.mxu0 0.0
    %707 = vmatpush1.xpose.msra.mxu0 0.0
    %708 = vmatprep.subr.mxu0 0.0
    %709 = vmatpush1.xpose.msra.mxu0 0.0
    %710 = vmatprep.subr.mxu0 0.0
    %711 = vmatpush1.xpose.msra.mxu0 0.0
    %712 = vmatprep.subr.mxu0 0.0
    %713 = vmatpush1.xpose.msra.mxu0 0.0
    %714 = vmatprep.subr.mxu0 0.0
    %715 = vmatpush1.xpose.msra.mxu0 0.0
    %716 = vmatprep.subr.mxu0 0.0
    %717 = vmatpush1.xpose.msra.mxu0 0.0
    %718 = vmatprep.subr.mxu0 0.0
    %719 = vmatpush1.xpose.msra.mxu0 0.0
    %720 = vmatprep.subr.mxu0 0.0
    %721 = vmatpush1.xpose.msra.mxu0 0.0
    %722 = vmatprep.subr.mxu0 0.0
    %723 = vmatpush1.xpose.msra.mxu0 0.0
    %724 = vmatprep.subr.mxu0 0.0
    %725 = vmatpush1.xpose.msra.mxu0 0.0
    %726 = vmatprep.subr.mxu0 0.0
    %727 = vmatpush1.xpose.msra.mxu0 %v694
    %728 = vmatprep.subr.mxu0 0.0
    %729 = vmatpush2.xpose.msra.mxu0 0.0
    %730 = vmatprep.subr.mxu0 0.0
    %731 = vmatpush2.xpose.msra.mxu0 0.0
    %732 = vmatprep.subr.mxu0 0.0
    %733 = vmatpush2.xpose.msra.mxu0 0.0
    %734 = vmatprep.subr.mxu0 0.0
    %735 = vmatpush2.xpose.msra.mxu0 0.0
    %736 = vmatprep.subr.mxu0 0.0
    %737 = vmatpush2.xpose.msra.mxu0 0.0
    %738 = vmatprep.subr.mxu0 0.0
    %739 = vmatpush2.xpose.msra.mxu0 0.0
    %740 = vmatprep.subr.mxu0 0.0
    %741 = vmatpush2.xpose.msra.mxu0 0.0
    %742 = vmatprep.subr.mxu0 0.0
    %743 = vmatpush2.xpose.msra.mxu0 0.0
    %744 = vmatprep.subr.mxu0 0.0
    %745 = vmatpush2.xpose.msra.mxu0 0.0
    %746 = vmatprep.subr.mxu0 0.0
    %747 = vmatpush2.xpose.msra.mxu0 0.0
    %748 = vmatprep.subr.mxu0 0.0
    %749 = vmatpush2.xpose.msra.mxu0 0.0
    %750 = vmatprep.subr.mxu0 0.0
    %751 = vmatpush2.xpose.msra.mxu0 0.0
    %752 = vmatprep.subr.mxu0 0.0
    %753 = vmatpush2.xpose.msra.mxu0 0.0
    %754 = vmatprep.subr.mxu0 0.0
    %755 = vmatpush2.xpose.msra.mxu0 0.0
    %756 = vmatprep.subr.mxu0 0.0
    %757 = vmatpush2.xpose.msra.mxu0 0.0
    %758 = vmatprep.subr.mxu0 0.0
    %759 = vmatpush2.xpose.msra.mxu0 0.0
    %760 = vmatprep.mubr.f32.mxu0 0.0
    %761 = vmatmul.mubr.f32.gmra.mxu0 %v692
    %v762 = vpop.f32.mrf.mxu0
    %v763 = vadd.f32 0.0, %v762
    %v764 = vpop.f32.mrf.mxu0
    %765 = vdwg.mxu0
    %v766 = vsel %vm159, %v231, -inf
    %767 = vmax.xlane.f32.xlu0 %v766
    %v768 = vpop.xlane.xlu0 %767
    %v769 = vsel %vm159, %v307, -inf
    %770 = vmax.xlane.f32.xlu0 %v769
    %v771 = vpop.xlane.xlu0 %770
    %v772 = vsel %vm159, %v383, -inf
    %773 = vmax.xlane.f32.xlu0 %v772
    %v774 = vpop.xlane.xlu0 %773
    %v775 = vsel %vm159, %v459, -inf
    %776 = vmax.xlane.f32.xlu0 %v775
    %v777 = vpop.xlane.xlu0 %776
    %v778 = vsel %vm159, %v535, -inf
    %779 = vmax.xlane.f32.xlu0 %v778
    %v780 = vpop.xlane.xlu0 %779
    %v781 = vsel %vm159, %v611, -inf
    %782 = vmax.xlane.f32.xlu0 %v781
    %v783 = vpop.xlane.xlu0 %782
    %v784 = vsel %vm159, %v687, -inf
    %785 = vmax.xlane.f32.xlu0 %v784
    %v786 = vpop.xlane.xlu0 %785
    %v787 = vsel %vm159, %v763, -inf
    %788 = vmax.xlane.f32.xlu0 %v787
    %v789 = vpop.xlane.xlu0 %788
    %v790 = vsub.f32 %v231, %v768
    %v791 = vsub.f32 %v307, %v771
    %v792 = vsub.f32 %v383, %v774
    %v793 = vsub.f32 %v459, %v777
    %v794 = vsub.f32 %v535, %v780
    %v795 = vsub.f32 %v611, %v783
    %v796 = vsub.f32 %v687, %v786
    %v797 = vsub.f32 %v763, %v789
    %v798 = vmul.f32 %v790, 1.442695
    %v799 = vpow.pop %v798
    %v800 = vmul.f32 %v791, 1.442695
    %v801 = vpow.pop %v800
    %v802 = vmul.f32 %v792, 1.442695
    %v803 = vpow.pop %v802
    %v804 = vmul.f32 %v793, 1.442695
    %v805 = vpow.pop %v804
    %v806 = vmul.f32 %v794, 1.442695
    %v807 = vpow.pop %v806
    %v808 = vmul.f32 %v795, 1.442695
    %v809 = vpow.pop %v808
    %v810 = vmul.f32 %v796, 1.442695
    %v811 = vpow.pop %v810
    %v812 = vmul.f32 %v797, 1.442695
    %v813 = vpow.pop %v812
    %v814 = vsel %vm159, %v799, 0.0
    %815 = vadd.xlane.f32.xlu0 %v814
    %v816 = vpop.xlane.xlu0 %815
    %v817 = vsel %vm159, %v801, 0.0
    %818 = vadd.xlane.f32.xlu0 %v817
    %v819 = vpop.xlane.xlu0 %818
    %v820 = vsel %vm159, %v803, 0.0
    %821 = vadd.xlane.f32.xlu0 %v820
    %v822 = vpop.xlane.xlu0 %821
    %v823 = vsel %vm159, %v805, 0.0
    %824 = vadd.xlane.f32.xlu0 %v823
    %v825 = vpop.xlane.xlu0 %824
    %v826 = vsel %vm159, %v807, 0.0
    %827 = vadd.xlane.f32.xlu0 %v826
    %v828 = vpop.xlane.xlu0 %827
    %v829 = vsel %vm159, %v809, 0.0
    %830 = vadd.xlane.f32.xlu0 %v829
    %v831 = vpop.xlane.xlu0 %830
    %v832 = vsel %vm159, %v811, 0.0
    %833 = vadd.xlane.f32.xlu0 %v832
    %v834 = vpop.xlane.xlu0 %833
    %v835 = vsel %vm159, %v813, 0.0
    %836 = vadd.xlane.f32.xlu0 %v835
    %v837 = vpop.xlane.xlu0 %836
    %v838 = vrcp.pop %v816
    %v839 = vrcp.pop %v819
    %v840 = vrcp.pop %v822
    %v841 = vrcp.pop %v825
    %v842 = vrcp.pop %v828
    %v843 = vrcp.pop %v831
    %v844 = vrcp.pop %v834
    %v845 = vrcp.pop %v837
    %v846 = vmul.f32 %v799, %v838
    %v847 = vmul.f32 %v801, %v839
    %v848 = vmul.f32 %v803, %v840
    %v849 = vmul.f32 %v805, %v841
    %v850 = vmul.f32 %v807, %v842
    %v851 = vmul.f32 %v809, %v843
    %v852 = vmul.f32 %v811, %v844
    %v853 = vmul.f32 %v813, %v845
    %854 = vrot.lane.b32.xlu0 %v135, 64
    %v855 = vpop.permute.xlu0 %854
    %v858 = vsel %vm159, %v846, 0
    %860 = vmatprep.subr.mxu0 0.0
    %861 = vmatpush1.msra.mxu0 0.0
    %862 = vmatprep.subr.mxu0 0.0
    %863 = vmatpush1.msra.mxu0 0.0
    %864 = vmatprep.subr.mxu0 0.0
    %865 = vmatpush1.msra.mxu0 0.0
    %866 = vmatprep.subr.mxu0 0.0
    %867 = vmatpush1.msra.mxu0 0.0
    %868 = vmatprep.subr.mxu0 0.0
    %869 = vmatpush1.msra.mxu0 0.0
    %870 = vmatprep.subr.mxu0 0.0
    %871 = vmatpush1.msra.mxu0 0.0
    %872 = vmatprep.subr.mxu0 0.0
    %873 = vmatpush1.msra.mxu0 0.0
    %874 = vmatprep.subr.mxu0 0.0
    %875 = vmatpush1.msra.mxu0 0.0
    %876 = vmatprep.subr.mxu0 0.0
    %877 = vmatpush1.msra.mxu0 0.0
    %878 = vmatprep.subr.mxu0 0.0
    %879 = vmatpush1.msra.mxu0 0.0
    %880 = vmatprep.subr.mxu0 0.0
    %881 = vmatpush1.msra.mxu0 0.0
    %882 = vmatprep.subr.mxu0 0.0
    %883 = vmatpush1.msra.mxu0 0.0
    %884 = vmatprep.subr.mxu0 0.0
    %885 = vmatpush1.msra.mxu0 0.0
    %886 = vmatprep.subr.mxu0 0.0
    %887 = vmatpush1.msra.mxu0 0.0
    %888 = vmatprep.subr.mxu0 0.0
    %889 = vmatpush1.msra.mxu0 0.0
    %890 = vmatprep.subr.mxu0 0.0
    %891 = vmatpush1.msra.mxu0 %v855
    %892 = vmatprep.subr.mxu0 0.0
    %893 = vmatpush2.msra.mxu0 0.0
    %894 = vmatprep.subr.mxu0 0.0
    %895 = vmatpush2.msra.mxu0 0.0
    %896 = vmatprep.subr.mxu0 0.0
    %897 = vmatpush2.msra.mxu0 0.0
    %898 = vmatprep.subr.mxu0 0.0
    %899 = vmatpush2.msra.mxu0 0.0
    %900 = vmatprep.subr.mxu0 0.0
    %901 = vmatpush2.msra.mxu0 0.0
    %902 = vmatprep.subr.mxu0 0.0
    %903 = vmatpush2.msra.mxu0 0.0
    %904 = vmatprep.subr.mxu0 0.0
    %905 = vmatpush2.msra.mxu0 0.0
    %906 = vmatprep.subr.mxu0 0.0
    %907 = vmatpush2.msra.mxu0 0.0
    %908 = vmatprep.subr.mxu0 0.0
    %909 = vmatpush2.msra.mxu0 0.0
    %910 = vmatprep.subr.mxu0 0.0
    %911 = vmatpush2.msra.mxu0 0.0
    %912 = vmatprep.subr.mxu0 0.0
    %913 = vmatpush2.msra.mxu0 0.0
    %914 = vmatprep.subr.mxu0 0.0
    %915 = vmatpush2.msra.mxu0 0.0
    %916 = vmatprep.subr.mxu0 0.0
    %917 = vmatpush2.msra.mxu0 0.0
    %918 = vmatprep.subr.mxu0 0.0
    %919 = vmatpush2.msra.mxu0 0.0
    %920 = vmatprep.subr.mxu0 0.0
    %921 = vmatpush2.msra.mxu0 0.0
    %922 = vmatprep.subr.mxu0 0.0
    %923 = vmatpush2.msra.mxu0 0.0
    %924 = vmatprep.mubr.f32.mxu0 0.0
    %925 = vmatmul.mubr.f32.gmra.mxu0 %v858
    %v926 = vpop.f32.mrf.mxu0
    %v927 = vadd.f32 0.0, %v926
    %v928 = vpop.f32.mrf.mxu0
    %929 = vdwg.mxu0
    %930 = vrot.lane.b32.xlu0 %v140, 64
    %v931 = vpop.permute.xlu0 %930
    %v934 = vsel %vm159, %v847, 0
    %936 = vmatprep.subr.mxu0 0.0
    %937 = vmatpush1.msra.mxu0 0.0
    %938 = vmatprep.subr.mxu0 0.0
    %939 = vmatpush1.msra.mxu0 0.0
    %940 = vmatprep.subr.mxu0 0.0
    %941 = vmatpush1.msra.mxu0 0.0
    %942 = vmatprep.subr.mxu0 0.0
    %943 = vmatpush1.msra.mxu0 0.0
    %944 = vmatprep.subr.mxu0 0.0
    %945 = vmatpush1.msra.mxu0 0.0
    %946 = vmatprep.subr.mxu0 0.0
    %947 = vmatpush1.msra.mxu0 0.0
    %948 = vmatprep.subr.mxu0 0.0
    %949 = vmatpush1.msra.mxu0 0.0
    %950 = vmatprep.subr.mxu0 0.0
    %951 = vmatpush1.msra.mxu0 0.0
    %952 = vmatprep.subr.mxu0 0.0
    %953 = vmatpush1.msra.mxu0 0.0
    %954 = vmatprep.subr.mxu0 0.0
    %955 = vmatpush1.msra.mxu0 0.0
    %956 = vmatprep.subr.mxu0 0.0
    %957 = vmatpush1.msra.mxu0 0.0
    %958 = vmatprep.subr.mxu0 0.0
    %959 = vmatpush1.msra.mxu0 0.0
    %960 = vmatprep.subr.mxu0 0.0
    %961 = vmatpush1.msra.mxu0 0.0
    %962 = vmatprep.subr.mxu0 0.0
    %963 = vmatpush1.msra.mxu0 0.0
    %964 = vmatprep.subr.mxu0 0.0
    %965 = vmatpush1.msra.mxu0 0.0
    %966 = vmatprep.subr.mxu0 0.0
    %967 = vmatpush1.msra.mxu0 %v931
    %968 = vmatprep.subr.mxu0 0.0
    %969 = vmatpush2.msra.mxu0 0.0
    %970 = vmatprep.subr.mxu0 0.0
    %971 = vmatpush2.msra.mxu0 0.0
    %972 = vmatprep.subr.mxu0 0.0
    %973 = vmatpush2.msra.mxu0 0.0
    %974 = vmatprep.subr.mxu0 0.0
    %975 = vmatpush2.msra.mxu0 0.0
    %976 = vmatprep.subr.mxu0 0.0
    %977 = vmatpush2.msra.mxu0 0.0
    %978 = vmatprep.subr.mxu0 0.0
    %979 = vmatpush2.msra.mxu0 0.0
    %980 = vmatprep.subr.mxu0 0.0
    %981 = vmatpush2.msra.mxu0 0.0
    %982 = vmatprep.subr.mxu0 0.0
    %983 = vmatpush2.msra.mxu0 0.0
    %984 = vmatprep.subr.mxu0 0.0
    %985 = vmatpush2.msra.mxu0 0.0
    %986 = vmatprep.subr.mxu0 0.0
    %987 = vmatpush2.msra.mxu0 0.0
    %988 = vmatprep.subr.mxu0 0.0
    %989 = vmatpush2.msra.mxu0 0.0
    %990 = vmatprep.subr.mxu0 0.0
    %991 = vmatpush2.msra.mxu0 0.0
    %992 = vmatprep.subr.mxu0 0.0
    %993 = vmatpush2.msra.mxu0 0.0
    %994 = vmatprep.subr.mxu0 0.0
    %995 = vmatpush2.msra.mxu0 0.0
    %996 = vmatprep.subr.mxu0 0.0
    %997 = vmatpush2.msra.mxu0 0.0
    %998 = vmatprep.subr.mxu0 0.0
    %999 = vmatpush2.msra.mxu0 0.0
    %1000 = vmatprep.mubr.f32.mxu0 0.0
    %1001 = vmatmul.mubr.f32.gmra.mxu0 %v934
    %v1002 = vpop.f32.mrf.mxu0
    %v1003 = vadd.f32 0.0, %v1002
    %v1004 = vpop.f32.mrf.mxu0
    %1005 = vdwg.mxu0
    %1006 = vrot.lane.b32.xlu0 %v146, 64
    %v1007 = vpop.permute.xlu0 %1006
    %v1010 = vsel %vm159, %v848, 0
    %1012 = vmatprep.subr.mxu0 0.0
    %1013 = vmatpush1.msra.mxu0 0.0
    %1014 = vmatprep.subr.mxu0 0.0
    %1015 = vmatpush1.msra.mxu0 0.0
    %1016 = vmatprep.subr.mxu0 0.0
    %1017 = vmatpush1.msra.mxu0 0.0
    %1018 = vmatprep.subr.mxu0 0.0
    %1019 = vmatpush1.msra.mxu0 0.0
    %1020 = vmatprep.subr.mxu0 0.0
    %1021 = vmatpush1.msra.mxu0 0.0
    %1022 = vmatprep.subr.mxu0 0.0
    %1023 = vmatpush1.msra.mxu0 0.0
    %1024 = vmatprep.subr.mxu0 0.0
    %1025 = vmatpush1.msra.mxu0 0.0
    %1026 = vmatprep.subr.mxu0 0.0
    %1027 = vmatpush1.msra.mxu0 0.0
    %1028 = vmatprep.subr.mxu0 0.0
    %1029 = vmatpush1.msra.mxu0 0.0
    %1030 = vmatprep.subr.mxu0 0.0
    %1031 = vmatpush1.msra.mxu0 0.0
    %1032 = vmatprep.subr.mxu0 0.0
    %1033 = vmatpush1.msra.mxu0 0.0
    %1034 = vmatprep.subr.mxu0 0.0
    %1035 = vmatpush1.msra.mxu0 0.0
    %1036 = vmatprep.subr.mxu0 0.0
    %1037 = vmatpush1.msra.mxu0 0.0
    %1038 = vmatprep.subr.mxu0 0.0
    %1039 = vmatpush1.msra.mxu0 0.0
    %1040 = vmatprep.subr.mxu0 0.0
    %1041 = vmatpush1.msra.mxu0 0.0
    %1042 = vmatprep.subr.mxu0 0.0
    %1043 = vmatpush1.msra.mxu0 %v1007
    %1044 = vmatprep.subr.mxu0 0.0
    %1045 = vmatpush2.msra.mxu0 0.0
    %1046 = vmatprep.subr.mxu0 0.0
    %1047 = vmatpush2.msra.mxu0 0.0
    %1048 = vmatprep.subr.mxu0 0.0
    %1049 = vmatpush2.msra.mxu0 0.0
    %1050 = vmatprep.subr.mxu0 0.0
    %1051 = vmatpush2.msra.mxu0 0.0
    %1052 = vmatprep.subr.mxu0 0.0
    %1053 = vmatpush2.msra.mxu0 0.0
    %1054 = vmatprep.subr.mxu0 0.0
    %1055 = vmatpush2.msra.mxu0 0.0
    %1056 = vmatprep.subr.mxu0 0.0
    %1057 = vmatpush2.msra.mxu0 0.0
    %1058 = vmatprep.subr.mxu0 0.0
    %1059 = vmatpush2.msra.mxu0 0.0
    %1060 = vmatprep.subr.mxu0 0.0
    %1061 = vmatpush2.msra.mxu0 0.0
    %1062 = vmatprep.subr.mxu0 0.0
    %1063 = vmatpush2.msra.mxu0 0.0
    %1064 = vmatprep.subr.mxu0 0.0
    %1065 = vmatpush2.msra.mxu0 0.0
    %1066 = vmatprep.subr.mxu0 0.0
    %1067 = vmatpush2.msra.mxu0 0.0
    %1068 = vmatprep.subr.mxu0 0.0
    %1069 = vmatpush2.msra.mxu0 0.0
    %1070 = vmatprep.subr.mxu0 0.0
    %1071 = vmatpush2.msra.mxu0 0.0
    %1072 = vmatprep.subr.mxu0 0.0
    %1073 = vmatpush2.msra.mxu0 0.0
    %1074 = vmatprep.subr.mxu0 0.0
    %1075 = vmatpush2.msra.mxu0 0.0
    %1076 = vmatprep.mubr.f32.mxu0 0.0
    %1077 = vmatmul.mubr.f32.gmra.mxu0 %v1010
    %v1078 = vpop.f32.mrf.mxu0
    %v1079 = vadd.f32 0.0, %v1078
    %v1080 = vpop.f32.mrf.mxu0
    %1081 = vdwg.mxu0
    %1082 = vrot.lane.b32.xlu0 %v148, 64
    %v1083 = vpop.permute.xlu0 %1082
    %v1086 = vsel %vm159, %v849, 0
    %1088 = vmatprep.subr.mxu0 0.0
    %1089 = vmatpush1.msra.mxu0 0.0
    %1090 = vmatprep.subr.mxu0 0.0
    %1091 = vmatpush1.msra.mxu0 0.0
    %1092 = vmatprep.subr.mxu0 0.0
    %1093 = vmatpush1.msra.mxu0 0.0
    %1094 = vmatprep.subr.mxu0 0.0
    %1095 = vmatpush1.msra.mxu0 0.0
    %1096 = vmatprep.subr.mxu0 0.0
    %1097 = vmatpush1.msra.mxu0 0.0
    %1098 = vmatprep.subr.mxu0 0.0
    %1099 = vmatpush1.msra.mxu0 0.0
    %1100 = vmatprep.subr.mxu0 0.0
    %1101 = vmatpush1.msra.mxu0 0.0
    %1102 = vmatprep.subr.mxu0 0.0
    %1103 = vmatpush1.msra.mxu0 0.0
    %1104 = vmatprep.subr.mxu0 0.0
    %1105 = vmatpush1.msra.mxu0 0.0
    %1106 = vmatprep.subr.mxu0 0.0
    %1107 = vmatpush1.msra.mxu0 0.0
    %1108 = vmatprep.subr.mxu0 0.0
    %1109 = vmatpush1.msra.mxu0 0.0
    %1110 = vmatprep.subr.mxu0 0.0
    %1111 = vmatpush1.msra.mxu0 0.0
    %1112 = vmatprep.subr.mxu0 0.0
    %1113 = vmatpush1.msra.mxu0 0.0
    %1114 = vmatprep.subr.mxu0 0.0
    %1115 = vmatpush1.msra.mxu0 0.0
    %1116 = vmatprep.subr.mxu0 0.0
    %1117 = vmatpush1.msra.mxu0 0.0
    %1118 = vmatprep.subr.mxu0 0.0
    %1119 = vmatpush1.msra.mxu0 %v1083
    %1120 = vmatprep.subr.mxu0 0.0
    %1121 = vmatpush2.msra.mxu0 0.0
    %1122 = vmatprep.subr.mxu0 0.0
    %1123 = vmatpush2.msra.mxu0 0.0
    %1124 = vmatprep.subr.mxu0 0.0
    %1125 = vmatpush2.msra.mxu0 0.0
    %1126 = vmatprep.subr.mxu0 0.0
    %1127 = vmatpush2.msra.mxu0 0.0
    %1128 = vmatprep.subr.mxu0 0.0
    %1129 = vmatpush2.msra.mxu0 0.0
    %1130 = vmatprep.subr.mxu0 0.0
    %1131 = vmatpush2.msra.mxu0 0.0
    %1132 = vmatprep.subr.mxu0 0.0
    %1133 = vmatpush2.msra.mxu0 0.0
    %1134 = vmatprep.subr.mxu0 0.0
    %1135 = vmatpush2.msra.mxu0 0.0
    %1136 = vmatprep.subr.mxu0 0.0
    %1137 = vmatpush2.msra.mxu0 0.0
    %1138 = vmatprep.subr.mxu0 0.0
    %1139 = vmatpush2.msra.mxu0 0.0
    %1140 = vmatprep.subr.mxu0 0.0
    %1141 = vmatpush2.msra.mxu0 0.0
    %1142 = vmatprep.subr.mxu0 0.0
    %1143 = vmatpush2.msra.mxu0 0.0
    %1144 = vmatprep.subr.mxu0 0.0
    %1145 = vmatpush2.msra.mxu0 0.0
    %1146 = vmatprep.subr.mxu0 0.0
    %1147 = vmatpush2.msra.mxu0 0.0
    %1148 = vmatprep.subr.mxu0 0.0
    %1149 = vmatpush2.msra.mxu0 0.0
    %1150 = vmatprep.subr.mxu0 0.0
    %1151 = vmatpush2.msra.mxu0 0.0
    %1152 = vmatprep.mubr.f32.mxu0 0.0
    %1153 = vmatmul.mubr.f32.gmra.mxu0 %v1086
    %v1154 = vpop.f32.mrf.mxu0
    %v1155 = vadd.f32 0.0, %v1154
    %v1156 = vpop.f32.mrf.mxu0
    %1157 = vdwg.mxu0
    %1158 = vrot.lane.b32.xlu0 %v150, 64
    %v1159 = vpop.permute.xlu0 %1158
    %v1162 = vsel %vm159, %v850, 0
    %1164 = vmatprep.subr.mxu0 0.0
    %1165 = vmatpush1.msra.mxu0 0.0
    %1166 = vmatprep.subr.mxu0 0.0
    %1167 = vmatpush1.msra.mxu0 0.0
    %1168 = vmatprep.subr.mxu0 0.0
    %1169 = vmatpush1.msra.mxu0 0.0
    %1170 = vmatprep.subr.mxu0 0.0
    %1171 = vmatpush1.msra.mxu0 0.0
    %1172 = vmatprep.subr.mxu0 0.0
    %1173 = vmatpush1.msra.mxu0 0.0
    %1174 = vmatprep.subr.mxu0 0.0
    %1175 = vmatpush1.msra.mxu0 0.0
    %1176 = vmatprep.subr.mxu0 0.0
    %1177 = vmatpush1.msra.mxu0 0.0
    %1178 = vmatprep.subr.mxu0 0.0
    %1179 = vmatpush1.msra.mxu0 0.0
    %1180 = vmatprep.subr.mxu0 0.0
    %1181 = vmatpush1.msra.mxu0 0.0
    %1182 = vmatprep.subr.mxu0 0.0
    %1183 = vmatpush1.msra.mxu0 0.0
    %1184 = vmatprep.subr.mxu0 0.0
    %1185 = vmatpush1.msra.mxu0 0.0
    %1186 = vmatprep.subr.mxu0 0.0
    %1187 = vmatpush1.msra.mxu0 0.0
    %1188 = vmatprep.subr.mxu0 0.0
    %1189 = vmatpush1.msra.mxu0 0.0
    %1190 = vmatprep.subr.mxu0 0.0
    %1191 = vmatpush1.msra.mxu0 0.0
    %1192 = vmatprep.subr.mxu0 0.0
    %1193 = vmatpush1.msra.mxu0 0.0
    %1194 = vmatprep.subr.mxu0 0.0
    %1195 = vmatpush1.msra.mxu0 %v1159
    %1196 = vmatprep.subr.mxu0 0.0
    %1197 = vmatpush2.msra.mxu0 0.0
    %1198 = vmatprep.subr.mxu0 0.0
    %1199 = vmatpush2.msra.mxu0 0.0
    %1200 = vmatprep.subr.mxu0 0.0
    %1201 = vmatpush2.msra.mxu0 0.0
    %1202 = vmatprep.subr.mxu0 0.0
    %1203 = vmatpush2.msra.mxu0 0.0
    %1204 = vmatprep.subr.mxu0 0.0
    %1205 = vmatpush2.msra.mxu0 0.0
    %1206 = vmatprep.subr.mxu0 0.0
    %1207 = vmatpush2.msra.mxu0 0.0
    %1208 = vmatprep.subr.mxu0 0.0
    %1209 = vmatpush2.msra.mxu0 0.0
    %1210 = vmatprep.subr.mxu0 0.0
    %1211 = vmatpush2.msra.mxu0 0.0
    %1212 = vmatprep.subr.mxu0 0.0
    %1213 = vmatpush2.msra.mxu0 0.0
    %1214 = vmatprep.subr.mxu0 0.0
    %1215 = vmatpush2.msra.mxu0 0.0
    %1216 = vmatprep.subr.mxu0 0.0
    %1217 = vmatpush2.msra.mxu0 0.0
    %1218 = vmatprep.subr.mxu0 0.0
    %1219 = vmatpush2.msra.mxu0 0.0
    %1220 = vmatprep.subr.mxu0 0.0
    %1221 = vmatpush2.msra.mxu0 0.0
    %1222 = vmatprep.subr.mxu0 0.0
    %1223 = vmatpush2.msra.mxu0 0.0
    %1224 = vmatprep.subr.mxu0 0.0
    %1225 = vmatpush2.msra.mxu0 0.0
    %1226 = vmatprep.subr.mxu0 0.0
    %1227 = vmatpush2.msra.mxu0 0.0
    %1228 = vmatprep.mubr.f32.mxu0 0.0
    %1229 = vmatmul.mubr.f32.gmra.mxu0 %v1162
    %v1230 = vpop.f32.mrf.mxu0
    %v1231 = vadd.f32 0.0, %v1230
    %v1232 = vpop.f32.mrf.mxu0
    %1233 = vdwg.mxu0
    %1234 = vrot.lane.b32.xlu0 %v152, 64
    %v1235 = vpop.permute.xlu0 %1234
    %v1238 = vsel %vm159, %v851, 0
    %1240 = vmatprep.subr.mxu0 0.0
    %1241 = vmatpush1.msra.mxu0 0.0
    %1242 = vmatprep.subr.mxu0 0.0
    %1243 = vmatpush1.msra.mxu0 0.0
    %1244 = vmatprep.subr.mxu0 0.0
    %1245 = vmatpush1.msra.mxu0 0.0
    %1246 = vmatprep.subr.mxu0 0.0
    %1247 = vmatpush1.msra.mxu0 0.0
    %1248 = vmatprep.subr.mxu0 0.0
    %1249 = vmatpush1.msra.mxu0 0.0
    %1250 = vmatprep.subr.mxu0 0.0
    %1251 = vmatpush1.msra.mxu0 0.0
    %1252 = vmatprep.subr.mxu0 0.0
    %1253 = vmatpush1.msra.mxu0 0.0
    %1254 = vmatprep.subr.mxu0 0.0
    %1255 = vmatpush1.msra.mxu0 0.0
    %1256 = vmatprep.subr.mxu0 0.0
    %1257 = vmatpush1.msra.mxu0 0.0
    %1258 = vmatprep.subr.mxu0 0.0
    %1259 = vmatpush1.msra.mxu0 0.0
    %1260 = vmatprep.subr.mxu0 0.0
    %1261 = vmatpush1.msra.mxu0 0.0
    %1262 = vmatprep.subr.mxu0 0.0
    %1263 = vmatpush1.msra.mxu0 0.0
    %1264 = vmatprep.subr.mxu0 0.0
    %1265 = vmatpush1.msra.mxu0 0.0
    %1266 = vmatprep.subr.mxu0 0.0
    %1267 = vmatpush1.msra.mxu0 0.0
    %1268 = vmatprep.subr.mxu0 0.0
    %1269 = vmatpush1.msra.mxu0 0.0
    %1270 = vmatprep.subr.mxu0 0.0
    %1271 = vmatpush1.msra.mxu0 %v1235
    %1272 = vmatprep.subr.mxu0 0.0
    %1273 = vmatpush2.msra.mxu0 0.0
    %1274 = vmatprep.subr.mxu0 0.0
    %1275 = vmatpush2.msra.mxu0 0.0
    %1276 = vmatprep.subr.mxu0 0.0
    %1277 = vmatpush2.msra.mxu0 0.0
    %1278 = vmatprep.subr.mxu0 0.0
    %1279 = vmatpush2.msra.mxu0 0.0
    %1280 = vmatprep.subr.mxu0 0.0
    %1281 = vmatpush2.msra.mxu0 0.0
    %1282 = vmatprep.subr.mxu0 0.0
    %1283 = vmatpush2.msra.mxu0 0.0
    %1284 = vmatprep.subr.mxu0 0.0
    %1285 = vmatpush2.msra.mxu0 0.0
    %1286 = vmatprep.subr.mxu0 0.0
    %1287 = vmatpush2.msra.mxu0 0.0
    %1288 = vmatprep.subr.mxu0 0.0
    %1289 = vmatpush2.msra.mxu0 0.0
    %1290 = vmatprep.subr.mxu0 0.0
    %1291 = vmatpush2.msra.mxu0 0.0
    %1292 = vmatprep.subr.mxu0 0.0
    %1293 = vmatpush2.msra.mxu0 0.0
    %1294 = vmatprep.subr.mxu0 0.0
    %1295 = vmatpush2.msra.mxu0 0.0
    %1296 = vmatprep.subr.mxu0 0.0
    %1297 = vmatpush2.msra.mxu0 0.0
    %1298 = vmatprep.subr.mxu0 0.0
    %1299 = vmatpush2.msra.mxu0 0.0
    %1300 = vmatprep.subr.mxu0 0.0
    %1301 = vmatpush2.msra.mxu0 0.0
    %1302 = vmatprep.subr.mxu0 0.0
    %1303 = vmatpush2.msra.mxu0 0.0
    %1304 = vmatprep.mubr.f32.mxu0 0.0
    %1305 = vmatmul.mubr.f32.gmra.mxu0 %v1238
    %v1306 = vpop.f32.mrf.mxu0
    %v1307 = vadd.f32 0.0, %v1306
    %v1308 = vpop.f32.mrf.mxu0
    %1309 = vdwg.mxu0
    %1310 = vrot.lane.b32.xlu0 %v154, 64
    %v1311 = vpop.permute.xlu0 %1310
    %v1314 = vsel %vm159, %v852, 0
    %1316 = vmatprep.subr.mxu0 0.0
    %1317 = vmatpush1.msra.mxu0 0.0
    %1318 = vmatprep.subr.mxu0 0.0
    %1319 = vmatpush1.msra.mxu0 0.0
    %1320 = vmatprep.subr.mxu0 0.0
    %1321 = vmatpush1.msra.mxu0 0.0
    %1322 = vmatprep.subr.mxu0 0.0
    %1323 = vmatpush1.msra.mxu0 0.0
    %1324 = vmatprep.subr.mxu0 0.0
    %1325 = vmatpush1.msra.mxu0 0.0
    %1326 = vmatprep.subr.mxu0 0.0
    %1327 = vmatpush1.msra.mxu0 0.0
    %1328 = vmatprep.subr.mxu0 0.0
    %1329 = vmatpush1.msra.mxu0 0.0
    %1330 = vmatprep.subr.mxu0 0.0
    %1331 = vmatpush1.msra.mxu0 0.0
    %1332 = vmatprep.subr.mxu0 0.0
    %1333 = vmatpush1.msra.mxu0 0.0
    %1334 = vmatprep.subr.mxu0 0.0
    %1335 = vmatpush1.msra.mxu0 0.0
    %1336 = vmatprep.subr.mxu0 0.0
    %1337 = vmatpush1.msra.mxu0 0.0
    %1338 = vmatprep.subr.mxu0 0.0
    %1339 = vmatpush1.msra.mxu0 0.0
    %1340 = vmatprep.subr.mxu0 0.0
    %1341 = vmatpush1.msra.mxu0 0.0
    %1342 = vmatprep.subr.mxu0 0.0
    %1343 = vmatpush1.msra.mxu0 0.0
    %1344 = vmatprep.subr.mxu0 0.0
    %1345 = vmatpush1.msra.mxu0 0.0
    %1346 = vmatprep.subr.mxu0 0.0
    %1347 = vmatpush1.msra.mxu0 %v1311
    %1348 = vmatprep.subr.mxu0 0.0
    %1349 = vmatpush2.msra.mxu0 0.0
    %1350 = vmatprep.subr.mxu0 0.0
    %1351 = vmatpush2.msra.mxu0 0.0
    %1352 = vmatprep.subr.mxu0 0.0
    %1353 = vmatpush2.msra.mxu0 0.0
    %1354 = vmatprep.subr.mxu0 0.0
    %1355 = vmatpush2.msra.mxu0 0.0
    %1356 = vmatprep.subr.mxu0 0.0
    %1357 = vmatpush2.msra.mxu0 0.0
    %1358 = vmatprep.subr.mxu0 0.0
    %1359 = vmatpush2.msra.mxu0 0.0
    %1360 = vmatprep.subr.mxu0 0.0
    %1361 = vmatpush2.msra.mxu0 0.0
    %1362 = vmatprep.subr.mxu0 0.0
    %1363 = vmatpush2.msra.mxu0 0.0
    %1364 = vmatprep.subr.mxu0 0.0
    %1365 = vmatpush2.msra.mxu0 0.0
    %1366 = vmatprep.subr.mxu0 0.0
    %1367 = vmatpush2.msra.mxu0 0.0
    %1368 = vmatprep.subr.mxu0 0.0
    %1369 = vmatpush2.msra.mxu0 0.0
    %1370 = vmatprep.subr.mxu0 0.0
    %1371 = vmatpush2.msra.mxu0 0.0
    %1372 = vmatprep.subr.mxu0 0.0
    %1373 = vmatpush2.msra.mxu0 0.0
    %1374 = vmatprep.subr.mxu0 0.0
    %1375 = vmatpush2.msra.mxu0 0.0
    %1376 = vmatprep.subr.mxu0 0.0
    %1377 = vmatpush2.msra.mxu0 0.0
    %1378 = vmatprep.subr.mxu0 0.0
    %1379 = vmatpush2.msra.mxu0 0.0
    %1380 = vmatprep.mubr.f32.mxu0 0.0
    %1381 = vmatmul.mubr.f32.gmra.mxu0 %v1314
    %v1382 = vpop.f32.mrf.mxu0
    %v1383 = vadd.f32 0.0, %v1382
    %v1384 = vpop.f32.mrf.mxu0
    %1385 = vdwg.mxu0
    %1386 = vrot.lane.b32.xlu0 %v156, 64
    %v1387 = vpop.permute.xlu0 %1386
    %v1390 = vsel %vm159, %v853, 0
    %1392 = vmatprep.subr.mxu0 0.0
    %1393 = vmatpush1.msra.mxu0 0.0
    %1394 = vmatprep.subr.mxu0 0.0
    %1395 = vmatpush1.msra.mxu0 0.0
    %1396 = vmatprep.subr.mxu0 0.0
    %1397 = vmatpush1.msra.mxu0 0.0
    %1398 = vmatprep.subr.mxu0 0.0
    %1399 = vmatpush1.msra.mxu0 0.0
    %1400 = vmatprep.subr.mxu0 0.0
    %1401 = vmatpush1.msra.mxu0 0.0
    %1402 = vmatprep.subr.mxu0 0.0
    %1403 = vmatpush1.msra.mxu0 0.0
    %1404 = vmatprep.subr.mxu0 0.0
    %1405 = vmatpush1.msra.mxu0 0.0
    %1406 = vmatprep.subr.mxu0 0.0
    %1407 = vmatpush1.msra.mxu0 0.0
    %1408 = vmatprep.subr.mxu0 0.0
    %1409 = vmatpush1.msra.mxu0 0.0
    %1410 = vmatprep.subr.mxu0 0.0
    %1411 = vmatpush1.msra.mxu0 0.0
    %1412 = vmatprep.subr.mxu0 0.0
    %1413 = vmatpush1.msra.mxu0 0.0
    %1414 = vmatprep.subr.mxu0 0.0
    %1415 = vmatpush1.msra.mxu0 0.0
    %1416 = vmatprep.subr.mxu0 0.0
    %1417 = vmatpush1.msra.mxu0 0.0
    %1418 = vmatprep.subr.mxu0 0.0
    %1419 = vmatpush1.msra.mxu0 0.0
    %1420 = vmatprep.subr.mxu0 0.0
    %1421 = vmatpush1.msra.mxu0 0.0
    %1422 = vmatprep.subr.mxu0 0.0
    %1423 = vmatpush1.msra.mxu0 %v1387
    %1424 = vmatprep.subr.mxu0 0.0
    %1425 = vmatpush2.msra.mxu0 0.0
    %1426 = vmatprep.subr.mxu0 0.0
    %1427 = vmatpush2.msra.mxu0 0.0
    %1428 = vmatprep.subr.mxu0 0.0
    %1429 = vmatpush2.msra.mxu0 0.0
    %1430 = vmatprep.subr.mxu0 0.0
    %1431 = vmatpush2.msra.mxu0 0.0
    %1432 = vmatprep.subr.mxu0 0.0
    %1433 = vmatpush2.msra.mxu0 0.0
    %1434 = vmatprep.subr.mxu0 0.0
    %1435 = vmatpush2.msra.mxu0 0.0
    %1436 = vmatprep.subr.mxu0 0.0
    %1437 = vmatpush2.msra.mxu0 0.0
    %1438 = vmatprep.subr.mxu0 0.0
    %1439 = vmatpush2.msra.mxu0 0.0
    %1440 = vmatprep.subr.mxu0 0.0
    %1441 = vmatpush2.msra.mxu0 0.0
    %1442 = vmatprep.subr.mxu0 0.0
    %1443 = vmatpush2.msra.mxu0 0.0
    %1444 = vmatprep.subr.mxu0 0.0
    %1445 = vmatpush2.msra.mxu0 0.0
    %1446 = vmatprep.subr.mxu0 0.0
    %1447 = vmatpush2.msra.mxu0 0.0
    %1448 = vmatprep.subr.mxu0 0.0
    %1449 = vmatpush2.msra.mxu0 0.0
    %1450 = vmatprep.subr.mxu0 0.0
    %1451 = vmatpush2.msra.mxu0 0.0
    %1452 = vmatprep.subr.mxu0 0.0
    %1453 = vmatpush2.msra.mxu0 0.0
    %1454 = vmatprep.subr.mxu0 0.0
    %1455 = vmatpush2.msra.mxu0 0.0
    %1456 = vmatprep.mubr.f32.mxu0 0.0
    %1457 = vmatmul.mubr.f32.gmra.mxu0 %v1390
    %v1458 = vpop.f32.mrf.mxu0
    %v1459 = vadd.f32 0.0, %v1458
    %v1460 = vpop.f32.mrf.mxu0
    %1461 = vdwg.mxu0
    %v1462 = vld [vmem:[%s2] sm:$0xff]
    %v1463 = vld [vmem:[%s2 + $0x8] sm:$0xff]
    %v1465 = vsel %vm159, %v1079, 0
    %v1468 = vsel %vm159, %v1155, 0
    %1470 = vmatprep.subr.mxu0 0.0
    %1471 = vmatpush1.msra.mxu0 0.0
    %1472 = vmatprep.subr.mxu0 0.0
    %1473 = vmatpush1.msra.mxu0 0.0
    %1474 = vmatprep.subr.mxu0 0.0
    %1475 = vmatpush1.msra.mxu0 0.0
    %1476 = vmatprep.subr.mxu0 0.0
    %1477 = vmatpush1.msra.mxu0 0.0
    %1478 = vmatprep.subr.mxu0 0.0
    %1479 = vmatpush1.msra.mxu0 0.0
    %1480 = vmatprep.subr.mxu0 0.0
    %1481 = vmatpush1.msra.mxu0 0.0
    %1482 = vmatprep.subr.mxu0 0.0
    %1483 = vmatpush1.msra.mxu0 0.0
    %1484 = vmatprep.subr.mxu0 0.0
    %1485 = vmatpush1.msra.mxu0 0.0
    %1486 = vmatprep.subr.mxu0 0.0
    %1487 = vmatpush1.msra.mxu0 0.0
    %1488 = vmatprep.subr.mxu0 0.0
    %1489 = vmatpush1.msra.mxu0 0.0
    %1490 = vmatprep.subr.mxu0 0.0
    %1491 = vmatpush1.msra.mxu0 0.0
    %1492 = vmatprep.subr.mxu0 0.0
    %1493 = vmatpush1.msra.mxu0 0.0
    %1494 = vmatprep.subr.mxu0 0.0
    %1495 = vmatpush1.msra.mxu0 0.0
    %1496 = vmatprep.subr.mxu0 0.0
    %1497 = vmatpush1.msra.mxu0 0.0
    %1498 = vmatprep.subr.mxu0 0.0
    %1499 = vmatpush1.msra.mxu0 0.0
    %1500 = vmatprep.subr.mxu0 0.0
    %1501 = vmatpush1.msra.mxu0 %v1463
    %1502 = vmatprep.subr.mxu0 0.0
    %1503 = vmatpush2.msra.mxu0 0.0
    %1504 = vmatprep.subr.mxu0 0.0
    %1505 = vmatpush2.msra.mxu0 0.0
    %1506 = vmatprep.subr.mxu0 0.0
    %1507 = vmatpush2.msra.mxu0 0.0
    %1508 = vmatprep.subr.mxu0 0.0
    %1509 = vmatpush2.msra.mxu0 0.0
    %1510 = vmatprep.subr.mxu0 0.0
    %1511 = vmatpush2.msra.mxu0 0.0
    %1512 = vmatprep.subr.mxu0 0.0
    %1513 = vmatpush2.msra.mxu0 0.0
    %1514 = vmatprep.subr.mxu0 0.0
    %1515 = vmatpush2.msra.mxu0 0.0
    %1516 = vmatprep.subr.mxu0 0.0
    %1517 = vmatpush2.msra.mxu0 0.0
    %1518 = vmatprep.subr.mxu0 0.0
    %1519 = vmatpush2.msra.mxu0 0.0
    %1520 = vmatprep.subr.mxu0 0.0
    %1521 = vmatpush2.msra.mxu0 0.0
    %1522 = vmatprep.subr.mxu0 0.0
    %1523 = vmatpush2.msra.mxu0 0.0
    %1524 = vmatprep.subr.mxu0 0.0
    %1525 = vmatpush2.msra.mxu0 0.0
    %1526 = vmatprep.subr.mxu0 0.0
    %1527 = vmatpush2.msra.mxu0 0.0
    %1528 = vmatprep.subr.mxu0 0.0
    %1529 = vmatpush2.msra.mxu0 0.0
    %1530 = vmatprep.subr.mxu0 0.0
    %1531 = vmatpush2.msra.mxu0 0.0
    %1532 = vmatprep.subr.mxu0 0.0
    %1533 = vmatpush2.msra.mxu0 0.0
    %1534 = vmatprep.mubr.f32.mxu0 0.0
    %1535 = vmatmul.mubr.f32.gmra.mxu0 %v1465
    %v1536 = vpop.f32.mrf.mxu0
    %v1537 = vadd.f32 0.0, %v1536
    %v1538 = vpop.f32.mrf.mxu0
    %1539 = vmatprep.mubr.f32.mxu0 0.0
    %1540 = vmatmul.mubr.f32.gmra.mxu0 %v1468
    %v1541 = vpop.f32.mrf.mxu0
    %v1542 = vadd.f32 0.0, %v1541
    %v1543 = vpop.f32.mrf.mxu0
    %1544 = vdwg.mxu0
    %v1546 = vsel %vm159, %v927, 0
    %v1549 = vsel %vm159, %v1003, 0
    %1551 = vmatprep.subr.mxu0 0.0
    %1552 = vmatpush1.msra.mxu0 0.0
    %1553 = vmatprep.subr.mxu0 0.0
    %1554 = vmatpush1.msra.mxu0 0.0
    %1555 = vmatprep.subr.mxu0 0.0
    %1556 = vmatpush1.msra.mxu0 0.0
    %1557 = vmatprep.subr.mxu0 0.0
    %1558 = vmatpush1.msra.mxu0 0.0
    %1559 = vmatprep.subr.mxu0 0.0
    %1560 = vmatpush1.msra.mxu0 0.0
    %1561 = vmatprep.subr.mxu0 0.0
    %1562 = vmatpush1.msra.mxu0 0.0
    %1563 = vmatprep.subr.mxu0 0.0
    %1564 = vmatpush1.msra.mxu0 0.0
    %1565 = vmatprep.subr.mxu0 0.0
    %1566 = vmatpush1.msra.mxu0 0.0
    %1567 = vmatprep.subr.mxu0 0.0
    %1568 = vmatpush1.msra.mxu0 0.0
    %1569 = vmatprep.subr.mxu0 0.0
    %1570 = vmatpush1.msra.mxu0 0.0
    %1571 = vmatprep.subr.mxu0 0.0
    %1572 = vmatpush1.msra.mxu0 0.0
    %1573 = vmatprep.subr.mxu0 0.0
    %1574 = vmatpush1.msra.mxu0 0.0
    %1575 = vmatprep.subr.mxu0 0.0
    %1576 = vmatpush1.msra.mxu0 0.0
    %1577 = vmatprep.subr.mxu0 0.0
    %1578 = vmatpush1.msra.mxu0 0.0
    %1579 = vmatprep.subr.mxu0 0.0
    %1580 = vmatpush1.msra.mxu0 0.0
    %1581 = vmatprep.subr.mxu0 0.0
    %1582 = vmatpush1.msra.mxu0 %v1462
    %1583 = vmatprep.subr.mxu0 0.0
    %1584 = vmatpush2.msra.mxu0 0.0
    %1585 = vmatprep.subr.mxu0 0.0
    %1586 = vmatpush2.msra.mxu0 0.0
    %1587 = vmatprep.subr.mxu0 0.0
    %1588 = vmatpush2.msra.mxu0 0.0
    %1589 = vmatprep.subr.mxu0 0.0
    %1590 = vmatpush2.msra.mxu0 0.0
    %1591 = vmatprep.subr.mxu0 0.0
    %1592 = vmatpush2.msra.mxu0 0.0
    %1593 = vmatprep.subr.mxu0 0.0
    %1594 = vmatpush2.msra.mxu0 0.0
    %1595 = vmatprep.subr.mxu0 0.0
    %1596 = vmatpush2.msra.mxu0 0.0
    %1597 = vmatprep.subr.mxu0 0.0
    %1598 = vmatpush2.msra.mxu0 0.0
    %1599 = vmatprep.subr.mxu0 0.0
    %1600 = vmatpush2.msra.mxu0 0.0
    %1601 = vmatprep.subr.mxu0 0.0
    %1602 = vmatpush2.msra.mxu0 0.0
    %1603 = vmatprep.subr.mxu0 0.0
    %1604 = vmatpush2.msra.mxu0 0.0
    %1605 = vmatprep.subr.mxu0 0.0
    %1606 = vmatpush2.msra.mxu0 0.0
    %1607 = vmatprep.subr.mxu0 0.0
    %1608 = vmatpush2.msra.mxu0 0.0
    %1609 = vmatprep.subr.mxu0 0.0
    %1610 = vmatpush2.msra.mxu0 0.0
    %1611 = vmatprep.subr.mxu0 0.0
    %1612 = vmatpush2.msra.mxu0 0.0
    %1613 = vmatprep.subr.mxu0 0.0
    %1614 = vmatpush2.msra.mxu0 0.0
    %1615 = vmatprep.mubr.f32.mxu0 0.0
    %1616 = vmatmul.mubr.f32.gmra.mxu0 %v1546
    %v1617 = vpop.f32.mrf.mxu0
    %v1618 = vadd.f32 %v1537, %v1617
    %v1619 = vpop.f32.mrf.mxu0
    %1620 = vmatprep.mubr.f32.mxu0 0.0
    %1621 = vmatmul.mubr.f32.gmra.mxu0 %v1549
    %v1622 = vpop.f32.mrf.mxu0
    %v1623 = vadd.f32 %v1542, %v1622
    %v1624 = vpop.f32.mrf.mxu0
    %1625 = vdwg.mxu0
    %v1626 = vld [vmem:[%s2 + $0x10] sm:$0xff]
    %v1628 = vsel %vm159, %v1231, 0
    %v1631 = vsel %vm159, %v1307, 0
    %1633 = vmatprep.subr.mxu0 0.0
    %1634 = vmatpush1.msra.mxu0 0.0
    %1635 = vmatprep.subr.mxu0 0.0
    %1636 = vmatpush1.msra.mxu0 0.0
    %1637 = vmatprep.subr.mxu0 0.0
    %1638 = vmatpush1.msra.mxu0 0.0
    %1639 = vmatprep.subr.mxu0 0.0
    %1640 = vmatpush1.msra.mxu0 0.0
    %1641 = vmatprep.subr.mxu0 0.0
    %1642 = vmatpush1.msra.mxu0 0.0
    %1643 = vmatprep.subr.mxu0 0.0
    %1644 = vmatpush1.msra.mxu0 0.0
    %1645 = vmatprep.subr.mxu0 0.0
    %1646 = vmatpush1.msra.mxu0 0.0
    %1647 = vmatprep.subr.mxu0 0.0
    %1648 = vmatpush1.msra.mxu0 0.0
    %1649 = vmatprep.subr.mxu0 0.0
    %1650 = vmatpush1.msra.mxu0 0.0
    %1651 = vmatprep.subr.mxu0 0.0
    %1652 = vmatpush1.msra.mxu0 0.0
    %1653 = vmatprep.subr.mxu0 0.0
    %1654 = vmatpush1.msra.mxu0 0.0
    %1655 = vmatprep.subr.mxu0 0.0
    %1656 = vmatpush1.msra.mxu0 0.0
    %1657 = vmatprep.subr.mxu0 0.0
    %1658 = vmatpush1.msra.mxu0 0.0
    %1659 = vmatprep.subr.mxu0 0.0
    %1660 = vmatpush1.msra.mxu0 0.0
    %1661 = vmatprep.subr.mxu0 0.0
    %1662 = vmatpush1.msra.mxu0 0.0
    %1663 = vmatprep.subr.mxu0 0.0
    %1664 = vmatpush1.msra.mxu0 %v1626
    %1665 = vmatprep.subr.mxu0 0.0
    %1666 = vmatpush2.msra.mxu0 0.0
    %1667 = vmatprep.subr.mxu0 0.0
    %1668 = vmatpush2.msra.mxu0 0.0
    %1669 = vmatprep.subr.mxu0 0.0
    %1670 = vmatpush2.msra.mxu0 0.0
    %1671 = vmatprep.subr.mxu0 0.0
    %1672 = vmatpush2.msra.mxu0 0.0
    %1673 = vmatprep.subr.mxu0 0.0
    %1674 = vmatpush2.msra.mxu0 0.0
    %1675 = vmatprep.subr.mxu0 0.0
    %1676 = vmatpush2.msra.mxu0 0.0
    %1677 = vmatprep.subr.mxu0 0.0
    %1678 = vmatpush2.msra.mxu0 0.0
    %1679 = vmatprep.subr.mxu0 0.0
    %1680 = vmatpush2.msra.mxu0 0.0
    %1681 = vmatprep.subr.mxu0 0.0
    %1682 = vmatpush2.msra.mxu0 0.0
    %1683 = vmatprep.subr.mxu0 0.0
    %1684 = vmatpush2.msra.mxu0 0.0
    %1685 = vmatprep.subr.mxu0 0.0
    %1686 = vmatpush2.msra.mxu0 0.0
    %1687 = vmatprep.subr.mxu0 0.0
    %1688 = vmatpush2.msra.mxu0 0.0
    %1689 = vmatprep.subr.mxu0 0.0
    %1690 = vmatpush2.msra.mxu0 0.0
    %1691 = vmatprep.subr.mxu0 0.0
    %1692 = vmatpush2.msra.mxu0 0.0
    %1693 = vmatprep.subr.mxu0 0.0
    %1694 = vmatpush2.msra.mxu0 0.0
    %1695 = vmatprep.subr.mxu0 0.0
    %1696 = vmatpush2.msra.mxu0 0.0
    %1697 = vmatprep.mubr.f32.mxu0 0.0
    %1698 = vmatmul.mubr.f32.gmra.mxu0 %v1628
    %v1699 = vpop.f32.mrf.mxu0
    %v1700 = vadd.f32 0.0, %v1699
    %v1701 = vpop.f32.mrf.mxu0
    %1702 = vmatprep.mubr.f32.mxu0 0.0
    %1703 = vmatmul.mubr.f32.gmra.mxu0 %v1631
    %v1704 = vpop.f32.mrf.mxu0
    %v1705 = vadd.f32 0.0, %v1704
    %v1706 = vpop.f32.mrf.mxu0
    %1707 = vdwg.mxu0
    %v1708 = vadd.f32 %v1618, %v1700
    %v1709 = vadd.f32 %v1623, %v1705
    %v1710 = vld [vmem:[%s2 + $0x18] sm:$0xff]
    %v1712 = vsel %vm159, %v1383, 0
    %v1715 = vsel %vm159, %v1459, 0
    %1717 = vmatprep.subr.mxu0 0.0
    %1718 = vmatpush1.msra.mxu0 0.0
    %1719 = vmatprep.subr.mxu0 0.0
    %1720 = vmatpush1.msra.mxu0 0.0
    %1721 = vmatprep.subr.mxu0 0.0
    %1722 = vmatpush1.msra.mxu0 0.0
    %1723 = vmatprep.subr.mxu0 0.0
    %1724 = vmatpush1.msra.mxu0 0.0
    %1725 = vmatprep.subr.mxu0 0.0
    %1726 = vmatpush1.msra.mxu0 0.0
    %1727 = vmatprep.subr.mxu0 0.0
    %1728 = vmatpush1.msra.mxu0 0.0
    %1729 = vmatprep.subr.mxu0 0.0
    %1730 = vmatpush1.msra.mxu0 0.0
    %1731 = vmatprep.subr.mxu0 0.0
    %1732 = vmatpush1.msra.mxu0 0.0
    %1733 = vmatprep.subr.mxu0 0.0
    %1734 = vmatpush1.msra.mxu0 0.0
    %1735 = vmatprep.subr.mxu0 0.0
    %1736 = vmatpush1.msra.mxu0 0.0
    %1737 = vmatprep.subr.mxu0 0.0
    %1738 = vmatpush1.msra.mxu0 0.0
    %1739 = vmatprep.subr.mxu0 0.0
    %1740 = vmatpush1.msra.mxu0 0.0
    %1741 = vmatprep.subr.mxu0 0.0
    %1742 = vmatpush1.msra.mxu0 0.0
    %1743 = vmatprep.subr.mxu0 0.0
    %1744 = vmatpush1.msra.mxu0 0.0
    %1745 = vmatprep.subr.mxu0 0.0
    %1746 = vmatpush1.msra.mxu0 0.0
    %1747 = vmatprep.subr.mxu0 0.0
    %1748 = vmatpush1.msra.mxu0 %v1710
    %1749 = vmatprep.subr.mxu0 0.0
    %1750 = vmatpush2.msra.mxu0 0.0
    %1751 = vmatprep.subr.mxu0 0.0
    %1752 = vmatpush2.msra.mxu0 0.0
    %1753 = vmatprep.subr.mxu0 0.0
    %1754 = vmatpush2.msra.mxu0 0.0
    %1755 = vmatprep.subr.mxu0 0.0
    %1756 = vmatpush2.msra.mxu0 0.0
    %1757 = vmatprep.subr.mxu0 0.0
    %1758 = vmatpush2.msra.mxu0 0.0
    %1759 = vmatprep.subr.mxu0 0.0
    %1760 = vmatpush2.msra.mxu0 0.0
    %1761 = vmatprep.subr.mxu0 0.0
    %1762 = vmatpush2.msra.mxu0 0.0
    %1763 = vmatprep.subr.mxu0 0.0
    %1764 = vmatpush2.msra.mxu0 0.0
    %1765 = vmatprep.subr.mxu0 0.0
    %1766 = vmatpush2.msra.mxu0 0.0
    %1767 = vmatprep.subr.mxu0 0.0
    %1768 = vmatpush2.msra.mxu0 0.0
    %1769 = vmatprep.subr.mxu0 0.0
    %1770 = vmatpush2.msra.mxu0 0.0
    %1771 = vmatprep.subr.mxu0 0.0
    %1772 = vmatpush2.msra.mxu0 0.0
    %1773 = vmatprep.subr.mxu0 0.0
    %1774 = vmatpush2.msra.mxu0 0.0
    %1775 = vmatprep.subr.mxu0 0.0
    %1776 = vmatpush2.msra.mxu0 0.0
    %1777 = vmatprep.subr.mxu0 0.0
    %1778 = vmatpush2.msra.mxu0 0.0
    %1779 = vmatprep.subr.mxu0 0.0
    %1780 = vmatpush2.msra.mxu0 0.0
    %1781 = vmatprep.mubr.f32.mxu0 0.0
    %1782 = vmatmul.mubr.f32.gmra.mxu0 %v1712
    %v1783 = vpop.f32.mrf.mxu0
    %v1784 = vadd.f32 0.0, %v1783
    %v1785 = vpop.f32.mrf.mxu0
    %1786 = vmatprep.mubr.f32.mxu0 0.0
    %1787 = vmatmul.mubr.f32.gmra.mxu0 %v1715
    %v1788 = vpop.f32.mrf.mxu0
    %v1789 = vadd.f32 0.0, %v1788
    %v1790 = vpop.f32.mrf.mxu0
    %1791 = vdwg.mxu0
    %v1792 = vadd.f32 %v1708, %v1784
    %v1793 = vadd.f32 %v1709, %v1789
    %v1794 = vld [vmem:[#allocation5 + $0x1] sm:$0x1]
    %v1795 = vlaneseq
    %v1796 = vshrl.u32 %v1795, 7
    %v1797 = vsub.s32 0, %v1796
    %v1798 = vrot.slane %v1794, %v1797
    %v1799 = vadd.f32 %v1792, %v1798
    %v1800 = vadd.f32 %v1793, %v1798
    %v1801 = vld [vmem:[#allocation5 + $0x2] sm:$0x1]
    %v1802 = vld [vmem:[#allocation5 + $0x3] sm:$0x1]
    %v1803 = vsel %vm61, %v1799, 0.0
    %1804 = vadd.xlane.f32.xlu0 %v1803
    %v1805 = vpop.xlane.xlu0 %1804
    %v1806 = vsel %vm61, %v1800, 0.0
    %1807 = vadd.xlane.f32.xlu0 %v1806
    %v1808 = vpop.xlane.xlu0 %1807
    %v1809 = vrcp.pop 32.0
    %v1810 = vmul.f32 %v1805, %v1809
    %v1811 = vmul.f32 %v1808, %v1809
    %v1812 = vmul.f32 %v1799, %v1799
    %v1813 = vmul.f32 %v1800, %v1800
    %v1814 = vsel %vm61, %v1812, 0.0
    %1815 = vadd.xlane.f32.xlu0 %v1814
    %v1816 = vpop.xlane.xlu0 %1815
    %v1817 = vsel %vm61, %v1813, 0.0
    %1818 = vadd.xlane.f32.xlu0 %v1817
    %v1819 = vpop.xlane.xlu0 %1818
    %v1820 = vmul.f32 %v1816, %v1809
    %v1821 = vmul.f32 %v1819, %v1809
    %v1822 = vmul.f32 %v1810, %v1810
    %v1823 = vmul.f32 %v1811, %v1811
    %v1824 = vsub.f32 %v1820, %v1822
    %v1825 = vsub.f32 %v1821, %v1823
    %v1826 = vsub.f32 %v1799, %v1810
    %v1827 = vsub.f32 %v1800, %v1811
    %v1828 = vadd.f32 %v1824, 1e-05
    %v1829 = vadd.f32 %v1825, 1e-05
    %v1830 = vrsqrt.pop %v1828
    %v1831 = vrsqrt.pop %v1829
    %v1832 = vmul.f32 %v1826, %v1830
    %v1833 = vmul.f32 %v1827, %v1831
    %v1834 = vlaneseq
    %v1835 = vshrl.u32 %v1834, 7
    %v1836 = vsub.s32 0, %v1835
    %v1837 = vrot.slane %v1801, %v1836
    %v1838 = vmul.f32 %v1832, %v1837
    %v1839 = vmul.f32 %v1833, %v1837
    %v1840 = vlaneseq
    %v1841 = vshrl.u32 %v1840, 7
    %v1842 = vsub.s32 0, %v1841
    %v1843 = vrot.slane %v1802, %v1842
    %v1844 = vadd.f32 %v1838, %v1843
    %v1845 = vadd.f32 %v1839, %v1843
    %v1846 = vld [vmem:[%s3] sm:$0xff]
    %v1847 = vld [vmem:[%s3 + $0x8] sm:$0xff]
    %v1848 = vld [vmem:[%s3 + $0x10] sm:$0xff]
    %v1849 = vld [vmem:[%s3 + $0x18] sm:$0xff]
    %v1850 = vld [vmem:[#allocation5 + $0x4] sm:$0x1]
    %v1851 = vlaneseq
    %v1852 = vshrl.u32 %v1851, 7
    %v1853 = vsub.s32 0, %v1852
    %v1854 = vrot.slane %v1850, %v1853
    %v1856 = vsel %vm61, %v1844, 0
    %v1859 = vsel %vm61, %v1845, 0
    %1861 = vmatprep.subr.mxu0 0.0
    %1862 = vmatpush1.msra.mxu0 0.0
    %1863 = vmatprep.subr.mxu0 0.0
    %1864 = vmatpush1.msra.mxu0 0.0
    %1865 = vmatprep.subr.mxu0 0.0
    %1866 = vmatpush1.msra.mxu0 0.0
    %1867 = vmatprep.subr.mxu0 0.0
    %1868 = vmatpush1.msra.mxu0 0.0
    %1869 = vmatprep.subr.mxu0 0.0
    %1870 = vmatpush1.msra.mxu0 0.0
    %1871 = vmatprep.subr.mxu0 0.0
    %1872 = vmatpush1.msra.mxu0 0.0
    %1873 = vmatprep.subr.mxu0 0.0
    %1874 = vmatpush1.msra.mxu0 0.0
    %1875 = vmatprep.subr.mxu0 0.0
    %1876 = vmatpush1.msra.mxu0 0.0
    %1877 = vmatprep.subr.mxu0 0.0
    %1878 = vmatpush1.msra.mxu0 0.0
    %1879 = vmatprep.subr.mxu0 0.0
    %1880 = vmatpush1.msra.mxu0 0.0
    %1881 = vmatprep.subr.mxu0 0.0
    %1882 = vmatpush1.msra.mxu0 0.0
    %1883 = vmatprep.subr.mxu0 0.0
    %1884 = vmatpush1.msra.mxu0 0.0
    %1885 = vmatprep.subr.mxu0 0.0
    %1886 = vmatpush1.msra.mxu0 %v1849
    %1887 = vmatprep.subr.mxu0 0.0
    %1888 = vmatpush1.msra.mxu0 %v1848
    %1889 = vmatprep.subr.mxu0 0.0
    %1890 = vmatpush1.msra.mxu0 %v1847
    %1891 = vmatprep.subr.mxu0 0.0
    %1892 = vmatpush1.msra.mxu0 %v1846
    %1893 = vmatprep.subr.mxu0 0.0
    %1894 = vmatpush2.msra.mxu0 0.0
    %1895 = vmatprep.subr.mxu0 0.0
    %1896 = vmatpush2.msra.mxu0 0.0
    %1897 = vmatprep.subr.mxu0 0.0
    %1898 = vmatpush2.msra.mxu0 0.0
    %1899 = vmatprep.subr.mxu0 0.0
    %1900 = vmatpush2.msra.mxu0 0.0
    %1901 = vmatprep.subr.mxu0 0.0
    %1902 = vmatpush2.msra.mxu0 0.0
    %1903 = vmatprep.subr.mxu0 0.0
    %1904 = vmatpush2.msra.mxu0 0.0
    %1905 = vmatprep.subr.mxu0 0.0
    %1906 = vmatpush2.msra.mxu0 0.0
    %1907 = vmatprep.subr.mxu0 0.0
    %1908 = vmatpush2.msra.mxu0 0.0
    %1909 = vmatprep.subr.mxu0 0.0
    %1910 = vmatpush2.msra.mxu0 0.0
    %1911 = vmatprep.subr.mxu0 0.0
    %1912 = vmatpush2.msra.mxu0 0.0
    %1913 = vmatprep.subr.mxu0 0.0
    %1914 = vmatpush2.msra.mxu0 0.0
    %1915 = vmatprep.subr.mxu0 0.0
    %1916 = vmatpush2.msra.mxu0 0.0
    %1917 = vmatprep.subr.mxu0 0.0
    %1918 = vmatpush2.msra.mxu0 0.0
    %1919 = vmatprep.subr.mxu0 0.0
    %1920 = vmatpush2.msra.mxu0 0.0
    %1921 = vmatprep.subr.mxu0 0.0
    %1922 = vmatpush2.msra.mxu0 0.0
    %1923 = vmatprep.subr.mxu0 0.0
    %1924 = vmatpush2.msra.mxu0 0.0
    %1925 = vmatprep.mubr.f32.mxu0 0.0
    %1926 = vmatmul.mubr.f32.gmra.mxu0 %v1856
    %v1927 = vpop.f32.mrf.mxu0
    %v1928 = vadd.f32 %v1854, %v1927
    %v1929 = vpop.f32.mrf.mxu0
    %1930 = vmatprep.mubr.f32.mxu0 0.0
    %1931 = vmatmul.mubr.f32.gmra.mxu0 %v1859
    %v1932 = vpop.f32.mrf.mxu0
    %v1933 = vadd.f32 %v1854, %v1932
    %v1934 = vpop.f32.mrf.mxu0
    %1935 = vdwg.mxu0
    %v1936 = vmax.f32 %v1928, 0.0
    %v1937 = vmax.f32 %v1933, 0.0
    %v1938 = vld [vmem:[%s4] sm:$0xff]
    %v1939 = vld [vmem:[%s4 + $0x8] sm:$0xff]
    %v1940 = vld [vmem:[%s4 + $0x10] sm:$0xff]
    %v1941 = vld [vmem:[%s4 + $0x18] sm:$0xff]
    %v1942 = vld [vmem:[%s4 + $0x20] sm:$0xff]
    %v1943 = vld [vmem:[%s4 + $0x28] sm:$0xff]
    %v1944 = vld [vmem:[%s4 + $0x30] sm:$0xff]
    %v1945 = vld [vmem:[%s4 + $0x38] sm:$0xff]
    %v1946 = vld [vmem:[#allocation5 + $0x5] sm:$0x1]
    %v1947 = vlaneseq
    %v1948 = vshrl.u32 %v1947, 7
    %v1949 = vsub.s32 0, %v1948
    %v1950 = vrot.slane %v1946, %v1949
    %vm1951 = vcmask 523264
    %v1953 = vsel %vm1951, %v1936, 0
    %v1956 = vsel %vm1951, %v1937, 0
    %1958 = vmatprep.subr.mxu0 0.0
    %1959 = vmatpush1.msra.mxu0 0.0
    %1960 = vmatprep.subr.mxu0 0.0
    %1961 = vmatpush1.msra.mxu0 0.0
    %1962 = vmatprep.subr.mxu0 0.0
    %1963 = vmatpush1.msra.mxu0 0.0
    %1964 = vmatprep.subr.mxu0 0.0
    %1965 = vmatpush1.msra.mxu0 0.0
    %1966 = vmatprep.subr.mxu0 0.0
    %1967 = vmatpush1.msra.mxu0 0.0
    %1968 = vmatprep.subr.mxu0 0.0
    %1969 = vmatpush1.msra.mxu0 0.0
    %1970 = vmatprep.subr.mxu0 0.0
    %1971 = vmatpush1.msra.mxu0 0.0
    %1972 = vmatprep.subr.mxu0 0.0
    %1973 = vmatpush1.msra.mxu0 0.0
    %1974 = vmatprep.subr.mxu0 0.0
    %1975 = vmatpush1.msra.mxu0 %v1945
    %1976 = vmatprep.subr.mxu0 0.0
    %1977 = vmatpush1.msra.mxu0 %v1944
    %1978 = vmatprep.subr.mxu0 0.0
    %1979 = vmatpush1.msra.mxu0 %v1943
    %1980 = vmatprep.subr.mxu0 0.0
    %1981 = vmatpush1.msra.mxu0 %v1942
    %1982 = vmatprep.subr.mxu0 0.0
    %1983 = vmatpush1.msra.mxu0 %v1941
    %1984 = vmatprep.subr.mxu0 0.0
    %1985 = vmatpush1.msra.mxu0 %v1940
    %1986 = vmatprep.subr.mxu0 0.0
    %1987 = vmatpush1.msra.mxu0 %v1939
    %1988 = vmatprep.subr.mxu0 0.0
    %1989 = vmatpush1.msra.mxu0 %v1938
    %1990 = vmatprep.subr.mxu0 0.0
    %1991 = vmatpush2.msra.mxu0 0.0
    %1992 = vmatprep.subr.mxu0 0.0
    %1993 = vmatpush2.msra.mxu0 0.0
    %1994 = vmatprep.subr.mxu0 0.0
    %1995 = vmatpush2.msra.mxu0 0.0
    %1996 = vmatprep.subr.mxu0 0.0
    %1997 = vmatpush2.msra.mxu0 0.0
    %1998 = vmatprep.subr.mxu0 0.0
    %1999 = vmatpush2.msra.mxu0 0.0
    %2000 = vmatprep.subr.mxu0 0.0
    %2001 = vmatpush2.msra.mxu0 0.0
    %2002 = vmatprep.subr.mxu0 0.0
    %2003 = vmatpush2.msra.mxu0 0.0
    %2004 = vmatprep.subr.mxu0 0.0
    %2005 = vmatpush2.msra.mxu0 0.0
    %2006 = vmatprep.subr.mxu0 0.0
    %2007 = vmatpush2.msra.mxu0 0.0
    %2008 = vmatprep.subr.mxu0 0.0
    %2009 = vmatpush2.msra.mxu0 0.0
    %2010 = vmatprep.subr.mxu0 0.0
    %2011 = vmatpush2.msra.mxu0 0.0
    %2012 = vmatprep.subr.mxu0 0.0
    %2013 = vmatpush2.msra.mxu0 0.0
    %2014 = vmatprep.subr.mxu0 0.0
    %2015 = vmatpush2.msra.mxu0 0.0
    %2016 = vmatprep.subr.mxu0 0.0
    %2017 = vmatpush2.msra.mxu0 0.0
    %2018 = vmatprep.subr.mxu0 0.0
    %2019 = vmatpush2.msra.mxu0 0.0
    %2020 = vmatprep.subr.mxu0 0.0
    %2021 = vmatpush2.msra.mxu0 0.0
    %2022 = vmatprep.mubr.f32.mxu0 0.0
    %2023 = vmatmul.mubr.f32.gmra.mxu0 %v1953
    %v2024 = vpop.f32.mrf.mxu0
    %v2025 = vadd.f32 %v1950, %v2024
    %v2026 = vpop.f32.mrf.mxu0
    %2027 = vmatprep.mubr.f32.mxu0 0.0
    %2028 = vmatmul.mubr.f32.gmra.mxu0 %v1956
    %v2029 = vpop.f32.mrf.mxu0
    %v2030 = vadd.f32 %v1950, %v2029
    %v2031 = vpop.f32.mrf.mxu0
    %2032 = vdwg.mxu0
    %v2033 = vld [vmem:[#allocation5 + $0x6] sm:$0x1]
    %v2034 = vld [vmem:[#allocation5 + $0x7] sm:$0x1]
    %v2035 = vsel %vm61, %v2025, 0.0
    %2036 = vadd.xlane.f32.xlu0 %v2035
    %v2037 = vpop.xlane.xlu0 %2036
    %v2038 = vsel %vm61, %v2030, 0.0
    %2039 = vadd.xlane.f32.xlu0 %v2038
    %v2040 = vpop.xlane.xlu0 %2039
    %v2041 = vmul.f32 %v2037, %v1809
    %v2042 = vmul.f32 %v2040, %v1809
    %v2043 = vmul.f32 %v2025, %v2025
    %v2044 = vmul.f32 %v2030, %v2030
    %v2045 = vsel %vm61, %v2043, 0.0
    %2046 = vadd.xlane.f32.xlu0 %v2045
    %v2047 = vpop.xlane.xlu0 %2046
    %v2048 = vsel %vm61, %v2044, 0.0
    %2049 = vadd.xlane.f32.xlu0 %v2048
    %v2050 = vpop.xlane.xlu0 %2049
    %v2051 = vmul.f32 %v2047, %v1809
    %v2052 = vmul.f32 %v2050, %v1809
    %v2053 = vmul.f32 %v2041, %v2041
    %v2054 = vmul.f32 %v2042, %v2042
    %v2055 = vsub.f32 %v2051, %v2053
    %v2056 = vsub.f32 %v2052, %v2054
    %v2057 = vsub.f32 %v2025, %v2041
    %v2058 = vsub.f32 %v2030, %v2042
    %v2059 = vadd.f32 %v2055, 1e-05
    %v2060 = vadd.f32 %v2056, 1e-05
    %v2061 = vrsqrt.pop %v2059
    %v2062 = vrsqrt.pop %v2060
    %v2063 = vmul.f32 %v2057, %v2061
    %v2064 = vmul.f32 %v2058, %v2062
    %v2065 = vlaneseq
    %v2066 = vshrl.u32 %v2065, 7
    %v2067 = vsub.s32 0, %v2066
    %v2068 = vrot.slane %v2033, %v2067
    %v2069 = vmul.f32 %v2063, %v2068
    %v2070 = vmul.f32 %v2064, %v2068
    %v2071 = vlaneseq
    %v2072 = vshrl.u32 %v2071, 7
    %v2073 = vsub.s32 0, %v2072
    %v2074 = vrot.slane %v2034, %v2073
    %v2075 = vadd.f32 %v2069, %v2074
    %v2076 = vadd.f32 %v2070, %v2074
    %2077 = vst.msk [vmem:[#allocation7] sm:$0xff] %vm61, %v2075
    %2078 = vst.msk [vmem:[#allocation7 + $0x8] sm:$0xff] %vm61, %v2076
    // Predicated region
    $region34: #{pc_transformer_block.1} parent=1 // pred_check
      _
    $region35: #{pc_transformer_block.1} parent=1 // pred_check_branch
      %2080 = sbr.rel (0) target = $region37
    $region36: #{pc_transformer_block.1} parent=1 // pred_region
      %s2082 = ssub.s32 256, 256
      %2083 = vsyncadd [#allocation4], %s2082
      %s2084 = sshll.u32 [#allocation7], 4
      %s2085 = int_to_ptr.vmem [resolvable:$true] %s2084
      %2090 = dma.vmem_to_hbm [thread:$0]  %s2085, 256, %s6, [#allocation4], 128, 128, 8
    $region37: #{pc_transformer_block.1} parent=1 // pred_fallthru
      _
    // Predicated region
    $region38: #{pc_transformer_block.1} parent=1 // pred_check
      _
    $region39: #{pc_transformer_block.1} parent=1 // pred_check_branch
      %2092 = sbr.rel (0) target = $region41
    $region40: #{pc_transformer_block.1} parent=1 // pred_region
      %2093 = dma.done [#allocation4], 256
    $region41: #{pc_transformer_block.1} parent=1 // pred_fallthru
      _
    %2094 = vsyncpa [#allocation3], 1
    %2095 = vsyncpa [#allocation6], 1
    %2096 = vsyncpa [#allocation4], 1

</llo_original>
